<compile_context>
chip_gen: v6e
topology: v6e:2x2x1
jax: 0.10.0
libtpu: 0.0.40
codegen_flags: <defaults>
</compile_context>

<pallas_src>
import itertools

import numpy as np
import jax
import jax.numpy as jnp
from jax import lax
from jax.experimental import pallas as pl
from jax.experimental.pallas import tpu as pltpu


N_ROWS = 30              # 12 (T_j top 3x4) + 12 (inv(T_i) top 3x4) + 6 (logR)
MAX_TILE_ELEMS = 8192    # elements per grid step at large M (~0.94 MiB/block)
CHUNK = 8 * 128          # one (8,128) vreg worth of elements
EPS = 1e-6

# Abramowitz & Stegun 4.4.46: acos(x) ~ sqrt(1-x) * poly(x), |err| <= 2e-8 on [0,1]
_ACOS_COEF = (1.5707963050, -0.2145988016, 0.0889789874, -0.0501743046,
              0.0308918810, -0.0170881256, 0.0066700901, -0.0012624911)


def _acos(x):
    """Polynomial arccos (f32); x must already be clipped inside (-1, 1)."""
    ax = jnp.abs(x)
    p = jnp.float32(_ACOS_COEF[-1])
    for c in _ACOS_COEF[-2::-1]:
        p = p * ax + jnp.float32(c)
    r = jnp.sqrt(jnp.maximum(1.0 - ax, 0.0)) * p
    return jnp.where(x < 0.0, jnp.float32(np.pi) - r, r)


def _choose_tile(M):
    """Tile size in elements: multiple of 1024, <= MAX_TILE_ELEMS, and sized so
    that large problems produce >= 2 tiles (v7x megacore) while tiny problems
    stay at a single minimally padded 1024-element tile."""
    t = 1024 * (-(-M // 2048))          # ~half the problem, rounded up to 1024
    return int(min(MAX_TILE_ELEMS, max(1024, t)))


# -----------------------------------------------------------------------------
# Pallas kernel
# -----------------------------------------------------------------------------
def _make_kernel(K, N, reg_weight, cost, tile_elems):
    reg_weight = float(reg_weight)
    n_chunks = tile_elems // CHUNK

    def _log_map(slab_ref, off):
        """SE(3) log map for one (8,128) chunk. Returns [w0,w1,w2,v0,v1,v2]."""
        def comp(i):                       # one packed component: (8, 128) f32
            return slab_ref[i, pl.ds(off, 8), :]

        A = [[comp(4 * a + b) for b in range(4)] for a in range(3)]
        B = [[comp(12 + 4 * a + b) for b in range(4)] for a in range(3)]

        # Tij = T_j @ inv(T_i), rows 0..2; inv(T_i) bottom row == [0, 0, 0, 1]
        T = []
        for a in range(3):
            row = []
            for b in range(4):
                v = A[a][0] * B[0][b] + A[a][1] * B[1][b] + A[a][2] * B[2][b]
                if b == 3:
                    v = v + A[a][3]
                row.append(v)
            T.append(row)

        # Trig replaced by algebra on cos(theta) from the product trace:
        #   sin(t)                = sqrt(1 - cos(t)^2)
        #   cos(t/2)/(2 sin(t/2)) = sin(t) / (2 (1 - cos(t)))
        trace = T[0][0] + T[1][1] + T[2][2]
        cos_t = jnp.clip((trace - 1.0) * 0.5, -1.0 + EPS, 1.0 - EPS)
        theta = _acos(cos_t) + EPS                      # in-kernel poly arccos
        sin_t = jnp.sqrt(jnp.maximum(1.0 - cos_t * cos_t, 1e-12))
        fac = theta * pl.reciprocal(2.0 * sin_t, approx=True)        # t/(2 sin t)
        half_cot = sin_t * pl.reciprocal(2.0 * (1.0 - cos_t), approx=True)
        # NOTE: same f32 cancellation behaviour as the reference formula near
        # identity; the c2*WW term is O(theta^2) so the error stays negligible.
        c2 = (1.0 - theta * half_cot) * pl.reciprocal(theta * theta, approx=True)

        w0 = fac * (T[2][1] - T[1][2])
        w1 = fac * (T[0][2] - T[2][0])
        w2 = fac * (T[1][0] - T[0][1])

        # W @ W for the skew matrix W(w) equals w w^T - |w|^2 I.
        p00, p11, p22 = w0 * w0, w1 * w1, w2 * w2
        p01, p02, p12 = w0 * w1, w0 * w2, w1 * w2
        W = [[0.0, -w2, w1],
             [w2, 0.0, -w0],
             [-w1, w0, 0.0]]
        WW = [[-(p11 + p22), p01, p02],
              [p01, -(p00 + p22), p12],
              [p02, p12, -(p00 + p11)]]
        Vinv = [[(1.0 if a == b else 0.0) - 0.5 * W[a][b] + c2 * WW[a][b]
                 for b in range(3)] for a in range(3)]

        tc = [T[0][3], T[1][3], T[2][3]]
        v = [Vinv[a][0] * tc[0] + Vinv[a][1] * tc[1] + Vinv[a][2] * tc[2]
             for a in range(3)]
        return [w0, w1, w2, v[0], v[1], v[2]]

    def _data_term(slab_ref, off, logT):
        data = jnp.zeros_like(logT[0])
        for r in range(6):                 # load logR late to keep vregs low
            d = logT[r] - slab_ref[24 + r, pl.ds(off, 8), :]
            if cost == 'l1':
                data = data + jnp.sqrt(d * d + 1e-6)
            else:                          # 'l2'
                data = data + (d * d + 1e-6)
        return data

    def kernel(slab_ref, out_ref):
        base = pl.program_id(0) * tile_elems
        zero = jnp.zeros((8, 128), jnp.float32)

        # Interior tiles: every element is a data pair -> no masks, no reg term.
        @pl.when(base + tile_elems <= K)
        def _():
            def body(s, acc):
                off = pl.multiple_of(s * 8, 8)
                logT = _log_map(slab_ref, off)
                return acc + _data_term(slab_ref, off, logT)
            out_ref[...] = lax.fori_loop(0, n_chunks, body, zero)

        # Tail tile(s): mask padded lanes, add the regularization elements.
        @pl.when(base + tile_elems > K)
        def _():
            sub_i = lax.broadcasted_iota(jnp.int32, (8, 128), 0)
            lane_i = lax.broadcasted_iota(jnp.int32, (8, 128), 1)
            local = sub_i * 128 + lane_i   # hoisted (iota is not CSE'd)

            def body(s, acc):
                off = pl.multiple_of(s * 8, 8)
                logT = _log_map(slab_ref, off)
                data = _data_term(slab_ref, off, logT)
                reg = (logT[0] * logT[0] + logT[1] * logT[1]
                       + logT[2] * logT[2] + logT[3] * logT[3]
                       + logT[4] * logT[4] + logT[5] * logT[5])
                gidx = base + s * CHUNK + local
                contrib = jnp.where(gidx < K, data, 0.0)
                contrib = contrib + reg_weight * jnp.where(
                    (gidx >= K) & (gidx < K + N), reg, 0.0)
                return acc + contrib
            out_ref[...] = lax.fori_loop(0, n_chunks, body, zero)

    return kernel


# -----------------------------------------------------------------------------
# JAX glue
# -----------------------------------------------------------------------------
def _compute_matrix_jax(angle, translation):
    # Mirrors InstanceRigidModel._compute_matrix.  Returns (4, 4, N) float32.
    a = angle.astype(jnp.float32) / 180.0 * jnp.pi
    t = translation.astype(jnp.float32)
    cos = jnp.cos(a)
    sin = jnp.sin(a)
    N = angle.shape[1]
    z = jnp.zeros((N,), jnp.float32)
    o = jnp.ones((N,), jnp.float32)
    row0 = jnp.stack([cos[2] * cos[1],
                      cos[2] * sin[1] * sin[0] - sin[2] * cos[0],
                      cos[2] * sin[1] * cos[0] + sin[2] * sin[0],
                      t[0]], axis=0)
    row1 = jnp.stack([sin[2] * cos[1],
                      sin[2] * sin[1] * sin[0] + cos[2] * cos[0],
                      sin[2] * sin[1] * cos[0] - cos[2] * sin[0],
                      t[1]], axis=0)
    row2 = jnp.stack([-sin[1], cos[1] * sin[0], cos[1] * cos[0], t[2]], axis=0)
    row3 = jnp.stack([z, z, z, o], axis=0)
    return jnp.stack([row0, row1, row2, row3], axis=0)


def make_instance_rigid_loss(N, reg_weight=0.001, cost='l1'):
    if cost not in ('l1', 'l2'):
        raise ValueError("Cost " + cost + " not valid. Choose 'l1' of 'l2'.")
    if N < 2:
        raise ValueError("Need at least 2 timepoints (otherwise K == 0).")
    K = N * (N - 1) // 2
    M = K + N                                  # data pairs + reg elements
    tile = _choose_tile(M)
    sub = tile // 128                          # multiple of 8 by construction
    n_tiles = -(-M // tile)                    # cdiv
    Mpad = n_tiles * tile
    pairs = list(itertools.combinations(range(N), 2))
    idx0 = jnp.asarray([p[0] for p in pairs], dtype=jnp.int32)
    idx1 = jnp.asarray([p[1] for p in pairs], dtype=jnp.int32)
    kernel = _make_kernel(K, N, reg_weight, cost, tile)

    @jax.jit
    def loss_fn(angle, translation, logRobs):
        Ti = _compute_matrix_jax(angle, translation)               # (4, 4, N)
        Ti_top = Ti[:3, :, :]                                      # (3, 4, N)

        # closed-form rigid inverse (replaces torch.inverse):
        #   [R t; 0 1]^-1 = [R^T, -R^T t; 0 1]
        RT = jnp.transpose(Ti[:3, :3, :], (1, 0, 2))
        tinv = -jnp.einsum('abn,bn->an', RT, Ti[:3, 3, :])
        Tinv_top = jnp.concatenate([RT, tinv[:, None, :]], axis=1)  # (3, 4, N)

        # per-element factors: K pairs followed by N reg elements.  The reg
        # elements use inv == identity so the kernel product returns Ti itself.
        I_top = jnp.broadcast_to(
            jnp.eye(3, 4, dtype=jnp.float32)[:, :, None], (3, 4, N))
        A_all = jnp.concatenate([Ti_top[:, :, idx1], Ti_top], axis=-1)   # (3,4,M)
        B_all = jnp.concatenate([Tinv_top[:, :, idx0], I_top], axis=-1)  # (3,4,M)

        pad = Mpad - M
        A_p = jnp.pad(A_all, ((0, 0), (0, 0), (0, pad)))
        B_p = jnp.pad(B_all, ((0, 0), (0, 0), (0, pad)))
        logR_p = jnp.pad(
            jnp.concatenate([logRobs.astype(jnp.float32),
                             jnp.zeros((6, N), jnp.float32)], axis=-1),
            ((0, 0), (0, pad)))

        # 30-row packed slab; theta is now computed inside the kernel.
        slab = jnp.concatenate([
            A_p.reshape(12, Mpad),             # T_j, top 3x4
            B_p.reshape(12, Mpad),             # inv(T_i), top 3x4
            logR_p,                            # observations (zeros for reg)
        ], axis=0).reshape(N_ROWS, Mpad // 128, 128)

        partials = pl.pallas_call(
            kernel,
            out_shape=jax.ShapeDtypeStruct((n_tiles * 8, 128), jnp.float32),
            grid=(n_tiles,),
            in_specs=[pl.BlockSpec((N_ROWS, sub, 128), lambda i: (0, i, 0))],
            out_specs=pl.BlockSpec((8, 128), lambda i: (i, 0)),
            compiler_params=pltpu.CompilerParams(
                dimension_semantics=("parallel",)),
        )(slab)
        return jnp.sum(partials) / K

    return loss_fn


# -----------------------------------------------------------------------------
# Pure-numpy reference (mirrors the PyTorch module, float64)
# -----------------------------------------------------------------------------
def _ref_compute_matrix(angle, translation):
    angles = angle / 180.0 * np.pi
    cos = np.cos(angles)
    sin = np.sin(angles)
    N = angle.shape[1]
    T = np.zeros((4, 4, N))
    T[0, 0] = cos[2] * cos[1]
    T[1, 0] = sin[2] * cos[1]
    T[2, 0] = -sin[1]
    T[0, 1] = cos[2] * sin[1] * sin[0] - sin[2] * cos[0]
    T[1, 1] = sin[2] * sin[1] * sin[0] + cos[2] * cos[0]
    T[2, 1] = cos[1] * sin[0]
    T[0, 2] = cos[2] * sin[1] * cos[0] + sin[2] * sin[0]
    T[1, 2] = sin[2] * sin[1] * cos[0] - cos[2] * sin[0]
    T[2, 2] = cos[1] * cos[0]
    T[0, 3] = translation[0]
    T[1, 3] = translation[1]
    T[2, 3] = translation[2]
    T[3, 3] = 1.0
    return T


def _ref_compute_log(Tij):
    K = Tij.shape[-1]
    R = Tij[:3, :3]
    Tr = Tij[:3, 3]
    out = np.zeros((6, K))
    eps = 1e-6
    for k in range(K):
        Rk = R[..., k]
        t = np.arccos(np.clip((np.trace(Rk) - 1) / 2, -1 + eps, 1 - eps)) + eps
        W = 1 / (2 * np.sin(t)) * (Rk - Rk.T) * t
        Vinv = (np.eye(3) - 0.5 * W
                + (1 - t * np.cos(t / 2) / (2 * np.sin(t / 2))) / t ** 2 * (W @ W))
        out[0, k] = 1 / (2 * np.sin(t)) * (Rk[2, 1] - Rk[1, 2]) * t
        out[1, k] = 1 / (2 * np.sin(t)) * (Rk[0, 2] - Rk[2, 0]) * t
        out[2, k] = 1 / (2 * np.sin(t)) * (Rk[1, 0] - Rk[0, 1]) * t
        out[3:, k] = Vinv @ Tr[..., k]
    return out


def ref_loss(angle, translation, logRobs, reg_weight=0.001, cost='l1'):
    N = angle.shape[1]
    K = N * (N - 1) // 2
    Ti = _ref_compute_matrix(angle, translation)
    Tij = np.zeros((4, 4, K))
    for k, (t0, t1) in enumerate(itertools.combinations(range(N), 2)):
        Tij[..., k] = Ti[..., t1] @ np.linalg.inv(Ti[..., t0])
    logTij = _ref_compute_log(Tij)
    logTi = _ref_compute_log(Ti)
    if cost == 'l1':
        loss = np.sum(np.sqrt((logTij - logRobs) ** 2 + 1e-6)) / K
    else:
        loss = np.sum((logTij - logRobs) ** 2 + 1e-6) / K
    loss += reg_weight * np.sum(logTi ** 2) / K
    return loss


# -----------------------------------------------------------------------------
# Demo / self-test
# -----------------------------------------------------------------------------
if __name__ == "__main__":
    def run_case(N, cost, key, reg_weight=0.001):
        K = N * (N - 1) // 2
        k1, k2, k3 = jax.random.split(key, 3)
        angle = jax.random.uniform(k1, (3, N), jnp.float32,
                                   minval=-20.0, maxval=20.0)
        translation = jax.random.normal(k2, (3, N), jnp.float32)
        logRobs = 0.1 * jax.random.normal(k3, (6, K), jnp.float32)

        loss_fn = make_instance_rigid_loss(N, reg_weight=reg_weight, cost=cost)
        loss = jax.block_until_ready(loss_fn(angle, translation, logRobs))

        expected = ref_loss(np.asarray(angle, np.float64),
                            np.asarray(translation, np.float64),
                            np.asarray(logRobs, np.float64),
                            reg_weight=reg_weight, cost=cost)
        # float32 + approx EUP reciprocals => looser tolerance than f64 ref
        np.testing.assert_allclose(np.asarray(loss), expected,
                                   rtol=2e-2, atol=5e-3)

    key = jax.random.PRNGKey(0)
    k_small, k_big = jax.random.split(key)
    # small case: single masked tail tile (module-sized demo, N=5 -> K=10)
    run_case(5, 'l1', k_small)
    # larger case: exercises the interior fast path + multi-chunk fori_loop
    # (N=70 -> K=2415, tile=2048 -> 2 tiles, 2 chunks per tile)
    run_case(70, 'l1', k_big)

    print("KERNEL_OK")
</pallas_src>

<mosaic_0001>
module attributes {stable_mosaic.version = 11 : i64} {
  func.func @kernel(%arg0: i32, %arg1: memref<30x8x128xf32, #tpu.memory_space<vmem>>, %arg2: memref<8x128xf32, #tpu.memory_space<vmem>>) attributes {dimension_semantics = [#tpu.dimension_semantics<parallel>], iteration_bounds = array<i64: 1>, scalar_prefetch = 0 : i64, scratch_operands = 0 : i64, tpu.core_type = #tpu.core_type<tc>, window_params = [{transform_indices = @transform_0, window_bounds = array<i64: 30, 8, 128>}, {transform_indices = @transform_1, window_bounds = array<i64: 8, 128>}]} {
    %c1024_i32 = arith.constant 1024 : i32
    %0 = arith.muli %arg0, %c1024_i32 : i32
    %cst = arith.constant 0.000000e+00 : f32
    %1 = vector.broadcast %cst : f32 to vector<8x128xf32>
    %c1024_i32_0 = arith.constant 1024 : i32
    %2 = arith.addi %0, %c1024_i32_0 : i32
    %c10_i32 = arith.constant 10 : i32
    %3 = arith.cmpi sle, %2, %c10_i32 : i32
    %4 = arith.extui %3 : i1 to i32
    %c0_i32 = arith.constant 0 : i32
    %5 = arith.cmpi ne, %4, %c0_i32 : i32
    scf.if %5 {
      %c0_i32_4 = arith.constant 0 : i32
      %c8_i32 = arith.constant 8 : i32
      %10 = arith.muli %c0_i32_4, %c8_i32 : i32
      %11 = tpu.assume_multiple %10, 8 : i32
      %c0 = arith.constant 0 : index
      %12 = arith.index_cast %11 : i32 to index
      %c0_5 = arith.constant 0 : index
      %13 = vector.load %arg1[%c0, %12, %c0_5] : memref<30x8x128xf32, #tpu.memory_space<vmem>>, vector<1x8x128xf32>
      %14 = vector.shape_cast %13 : vector<1x8x128xf32> to vector<8x128xf32>
      %c1 = arith.constant 1 : index
      %15 = arith.index_cast %11 : i32 to index
      %c0_6 = arith.constant 0 : index
      %16 = vector.load %arg1[%c1, %15, %c0_6] : memref<30x8x128xf32, #tpu.memory_space<vmem>>, vector<1x8x128xf32>
      %17 = vector.shape_cast %16 : vector<1x8x128xf32> to vector<8x128xf32>
      %c2 = arith.constant 2 : index
      %18 = arith.index_cast %11 : i32 to index
      %c0_7 = arith.constant 0 : index
      %19 = vector.load %arg1[%c2, %18, %c0_7] : memref<30x8x128xf32, #tpu.memory_space<vmem>>, vector<1x8x128xf32>
      %20 = vector.shape_cast %19 : vector<1x8x128xf32> to vector<8x128xf32>
      %c3 = arith.constant 3 : index
      %21 = arith.index_cast %11 : i32 to index
      %c0_8 = arith.constant 0 : index
      %22 = vector.load %arg1[%c3, %21, %c0_8] : memref<30x8x128xf32, #tpu.memory_space<vmem>>, vector<1x8x128xf32>
      %23 = vector.shape_cast %22 : vector<1x8x128xf32> to vector<8x128xf32>
      %c4 = arith.constant 4 : index
      %24 = arith.index_cast %11 : i32 to index
      %c0_9 = arith.constant 0 : index
      %25 = vector.load %arg1[%c4, %24, %c0_9] : memref<30x8x128xf32, #tpu.memory_space<vmem>>, vector<1x8x128xf32>
      %26 = vector.shape_cast %25 : vector<1x8x128xf32> to vector<8x128xf32>
      %c5 = arith.constant 5 : index
      %27 = arith.index_cast %11 : i32 to index
      %c0_10 = arith.constant 0 : index
      %28 = vector.load %arg1[%c5, %27, %c0_10] : memref<30x8x128xf32, #tpu.memory_space<vmem>>, vector<1x8x128xf32>
      %29 = vector.shape_cast %28 : vector<1x8x128xf32> to vector<8x128xf32>
      %c6 = arith.constant 6 : index
      %30 = arith.index_cast %11 : i32 to index
      %c0_11 = arith.constant 0 : index
      %31 = vector.load %arg1[%c6, %30, %c0_11] : memref<30x8x128xf32, #tpu.memory_space<vmem>>, vector<1x8x128xf32>
      %32 = vector.shape_cast %31 : vector<1x8x128xf32> to vector<8x128xf32>
      %c7 = arith.constant 7 : index
      %33 = arith.index_cast %11 : i32 to index
      %c0_12 = arith.constant 0 : index
      %34 = vector.load %arg1[%c7, %33, %c0_12] : memref<30x8x128xf32, #tpu.memory_space<vmem>>, vector<1x8x128xf32>
      %35 = vector.shape_cast %34 : vector<1x8x128xf32> to vector<8x128xf32>
      %c8 = arith.constant 8 : index
      %36 = arith.index_cast %11 : i32 to index
      %c0_13 = arith.constant 0 : index
      %37 = vector.load %arg1[%c8, %36, %c0_13] : memref<30x8x128xf32, #tpu.memory_space<vmem>>, vector<1x8x128xf32>
      %38 = vector.shape_cast %37 : vector<1x8x128xf32> to vector<8x128xf32>
      %c9 = arith.constant 9 : index
      %39 = arith.index_cast %11 : i32 to index
      %c0_14 = arith.constant 0 : index
      %40 = vector.load %arg1[%c9, %39, %c0_14] : memref<30x8x128xf32, #tpu.memory_space<vmem>>, vector<1x8x128xf32>
      %41 = vector.shape_cast %40 : vector<1x8x128xf32> to vector<8x128xf32>
      %c10 = arith.constant 10 : index
      %42 = arith.index_cast %11 : i32 to index
      %c0_15 = arith.constant 0 : index
      %43 = vector.load %arg1[%c10, %42, %c0_15] : memref<30x8x128xf32, #tpu.memory_space<vmem>>, vector<1x8x128xf32>
      %44 = vector.shape_cast %43 : vector<1x8x128xf32> to vector<8x128xf32>
      %c11 = arith.constant 11 : index
      %45 = arith.index_cast %11 : i32 to index
      %c0_16 = arith.constant 0 : index
      %46 = vector.load %arg1[%c11, %45, %c0_16] : memref<30x8x128xf32, #tpu.memory_space<vmem>>, vector<1x8x128xf32>
      %47 = vector.shape_cast %46 : vector<1x8x128xf32> to vector<8x128xf32>
      %c12 = arith.constant 12 : index
      %48 = arith.index_cast %11 : i32 to index
      %c0_17 = arith.constant 0 : index
      %49 = vector.load %arg1[%c12, %48, %c0_17] : memref<30x8x128xf32, #tpu.memory_space<vmem>>, vector<1x8x128xf32>
      %50 = vector.shape_cast %49 : vector<1x8x128xf32> to vector<8x128xf32>
      %c13 = arith.constant 13 : index
      %51 = arith.index_cast %11 : i32 to index
      %c0_18 = arith.constant 0 : index
      %52 = vector.load %arg1[%c13, %51, %c0_18] : memref<30x8x128xf32, #tpu.memory_space<vmem>>, vector<1x8x128xf32>
      %53 = vector.shape_cast %52 : vector<1x8x128xf32> to vector<8x128xf32>
      %c14 = arith.constant 14 : index
      %54 = arith.index_cast %11 : i32 to index
      %c0_19 = arith.constant 0 : index
      %55 = vector.load %arg1[%c14, %54, %c0_19] : memref<30x8x128xf32, #tpu.memory_space<vmem>>, vector<1x8x128xf32>
      %56 = vector.shape_cast %55 : vector<1x8x128xf32> to vector<8x128xf32>
      %c15 = arith.constant 15 : index
      %57 = arith.index_cast %11 : i32 to index
      %c0_20 = arith.constant 0 : index
      %58 = vector.load %arg1[%c15, %57, %c0_20] : memref<30x8x128xf32, #tpu.memory_space<vmem>>, vector<1x8x128xf32>
      %59 = vector.shape_cast %58 : vector<1x8x128xf32> to vector<8x128xf32>
      %c16 = arith.constant 16 : index
      %60 = arith.index_cast %11 : i32 to index
      %c0_21 = arith.constant 0 : index
      %61 = vector.load %arg1[%c16, %60, %c0_21] : memref<30x8x128xf32, #tpu.memory_space<vmem>>, vector<1x8x128xf32>
      %62 = vector.shape_cast %61 : vector<1x8x128xf32> to vector<8x128xf32>
      %c17 = arith.constant 17 : index
      %63 = arith.index_cast %11 : i32 to index
      %c0_22 = arith.constant 0 : index
      %64 = vector.load %arg1[%c17, %63, %c0_22] : memref<30x8x128xf32, #tpu.memory_space<vmem>>, vector<1x8x128xf32>
      %65 = vector.shape_cast %64 : vector<1x8x128xf32> to vector<8x128xf32>
      %c18 = arith.constant 18 : index
      %66 = arith.index_cast %11 : i32 to index
      %c0_23 = arith.constant 0 : index
      %67 = vector.load %arg1[%c18, %66, %c0_23] : memref<30x8x128xf32, #tpu.memory_space<vmem>>, vector<1x8x128xf32>
      %68 = vector.shape_cast %67 : vector<1x8x128xf32> to vector<8x128xf32>
      %c19 = arith.constant 19 : index
      %69 = arith.index_cast %11 : i32 to index
      %c0_24 = arith.constant 0 : index
      %70 = vector.load %arg1[%c19, %69, %c0_24] : memref<30x8x128xf32, #tpu.memory_space<vmem>>, vector<1x8x128xf32>
      %71 = vector.shape_cast %70 : vector<1x8x128xf32> to vector<8x128xf32>
      %c20 = arith.constant 20 : index
      %72 = arith.index_cast %11 : i32 to index
      %c0_25 = arith.constant 0 : index
      %73 = vector.load %arg1[%c20, %72, %c0_25] : memref<30x8x128xf32, #tpu.memory_space<vmem>>, vector<1x8x128xf32>
      %74 = vector.shape_cast %73 : vector<1x8x128xf32> to vector<8x128xf32>
      %c21 = arith.constant 21 : index
      %75 = arith.index_cast %11 : i32 to index
      %c0_26 = arith.constant 0 : index
      %76 = vector.load %arg1[%c21, %75, %c0_26] : memref<30x8x128xf32, #tpu.memory_space<vmem>>, vector<1x8x128xf32>
      %77 = vector.shape_cast %76 : vector<1x8x128xf32> to vector<8x128xf32>
      %c22 = arith.constant 22 : index
      %78 = arith.index_cast %11 : i32 to index
      %c0_27 = arith.constant 0 : index
      %79 = vector.load %arg1[%c22, %78, %c0_27] : memref<30x8x128xf32, #tpu.memory_space<vmem>>, vector<1x8x128xf32>
      %80 = vector.shape_cast %79 : vector<1x8x128xf32> to vector<8x128xf32>
      %c23 = arith.constant 23 : index
      %81 = arith.index_cast %11 : i32 to index
      %c0_28 = arith.constant 0 : index
      %82 = vector.load %arg1[%c23, %81, %c0_28] : memref<30x8x128xf32, #tpu.memory_space<vmem>>, vector<1x8x128xf32>
      %83 = vector.shape_cast %82 : vector<1x8x128xf32> to vector<8x128xf32>
      %84 = arith.mulf %14, %50 : vector<8x128xf32>
      %85 = arith.mulf %17, %62 : vector<8x128xf32>
      %86 = arith.addf %84, %85 : vector<8x128xf32>
      %87 = arith.mulf %20, %74 : vector<8x128xf32>
      %88 = arith.addf %86, %87 : vector<8x128xf32>
      %89 = arith.mulf %14, %53 : vector<8x128xf32>
      %90 = arith.mulf %17, %65 : vector<8x128xf32>
      %91 = arith.addf %89, %90 : vector<8x128xf32>
      %92 = arith.mulf %20, %77 : vector<8x128xf32>
      %93 = arith.addf %91, %92 : vector<8x128xf32>
      %94 = arith.mulf %14, %56 : vector<8x128xf32>
      %95 = arith.mulf %17, %68 : vector<8x128xf32>
      %96 = arith.addf %94, %95 : vector<8x128xf32>
      %97 = arith.mulf %20, %80 : vector<8x128xf32>
      %98 = arith.addf %96, %97 : vector<8x128xf32>
      %99 = arith.mulf %14, %59 : vector<8x128xf32>
      %100 = arith.mulf %17, %71 : vector<8x128xf32>
      %101 = arith.addf %99, %100 : vector<8x128xf32>
      %102 = arith.mulf %20, %83 : vector<8x128xf32>
      %103 = arith.addf %101, %102 : vector<8x128xf32>
      %104 = arith.addf %103, %23 : vector<8x128xf32>
      %105 = arith.mulf %26, %50 : vector<8x128xf32>
      %106 = arith.mulf %29, %62 : vector<8x128xf32>
      %107 = arith.addf %105, %106 : vector<8x128xf32>
      %108 = arith.mulf %32, %74 : vector<8x128xf32>
      %109 = arith.addf %107, %108 : vector<8x128xf32>
      %110 = arith.mulf %26, %53 : vector<8x128xf32>
      %111 = arith.mulf %29, %65 : vector<8x128xf32>
      %112 = arith.addf %110, %111 : vector<8x128xf32>
      %113 = arith.mulf %32, %77 : vector<8x128xf32>
      %114 = arith.addf %112, %113 : vector<8x128xf32>
      %115 = arith.mulf %26, %56 : vector<8x128xf32>
      %116 = arith.mulf %29, %68 : vector<8x128xf32>
      %117 = arith.addf %115, %116 : vector<8x128xf32>
      %118 = arith.mulf %32, %80 : vector<8x128xf32>
      %119 = arith.addf %117, %118 : vector<8x128xf32>
      %120 = arith.mulf %26, %59 : vector<8x128xf32>
      %121 = arith.mulf %29, %71 : vector<8x128xf32>
      %122 = arith.addf %120, %121 : vector<8x128xf32>
      %123 = arith.mulf %32, %83 : vector<8x128xf32>
      %124 = arith.addf %122, %123 : vector<8x128xf32>
      %125 = arith.addf %124, %35 : vector<8x128xf32>
      %126 = arith.mulf %38, %50 : vector<8x128xf32>
      %127 = arith.mulf %41, %62 : vector<8x128xf32>
      %128 = arith.addf %126, %127 : vector<8x128xf32>
      %129 = arith.mulf %44, %74 : vector<8x128xf32>
      %130 = arith.addf %128, %129 : vector<8x128xf32>
      %131 = arith.mulf %38, %53 : vector<8x128xf32>
      %132 = arith.mulf %41, %65 : vector<8x128xf32>
      %133 = arith.addf %131, %132 : vector<8x128xf32>
      %134 = arith.mulf %44, %77 : vector<8x128xf32>
      %135 = arith.addf %133, %134 : vector<8x128xf32>
      %136 = arith.mulf %38, %56 : vector<8x128xf32>
      %137 = arith.mulf %41, %68 : vector<8x128xf32>
      %138 = arith.addf %136, %137 : vector<8x128xf32>
      %139 = arith.mulf %44, %80 : vector<8x128xf32>
      %140 = arith.addf %138, %139 : vector<8x128xf32>
      %141 = arith.mulf %38, %59 : vector<8x128xf32>
      %142 = arith.mulf %41, %71 : vector<8x128xf32>
      %143 = arith.addf %141, %142 : vector<8x128xf32>
      %144 = arith.mulf %44, %83 : vector<8x128xf32>
      %145 = arith.addf %143, %144 : vector<8x128xf32>
      %146 = arith.addf %145, %47 : vector<8x128xf32>
      %147 = arith.addf %88, %114 : vector<8x128xf32>
      %148 = arith.addf %147, %140 : vector<8x128xf32>
      %cst_29 = arith.constant 1.000000e+00 : f32
      %149 = vector.broadcast %cst_29 : f32 to vector<8x128xf32>
      %150 = arith.subf %148, %149 : vector<8x128xf32>
      %cst_30 = arith.constant 5.000000e-01 : f32
      %151 = vector.broadcast %cst_30 : f32 to vector<8x128xf32>
      %152 = arith.mulf %150, %151 : vector<8x128xf32>
      %cst_31 = arith.constant -0.999998986 : f32
      %cst_32 = arith.constant 0.999998986 : f32
      %153 = vector.broadcast %cst_31 : f32 to vector<8x128xf32>
      %154 = arith.maximumf %153, %152 : vector<8x128xf32>
      %155 = vector.broadcast %cst_32 : f32 to vector<8x128xf32>
      %156 = arith.minimumf %155, %154 : vector<8x128xf32>
      %157 = math.absf %156 : vector<8x128xf32>
      %cst_33 = arith.constant -0.0012624911 : f32
      %158 = vector.broadcast %cst_33 : f32 to vector<8x128xf32>
      %159 = arith.mulf %158, %157 : vector<8x128xf32>
      %cst_34 = arith.constant 6.670090e-03 : f32
      %160 = vector.broadcast %cst_34 : f32 to vector<8x128xf32>
      %161 = arith.addf %159, %160 : vector<8x128xf32>
      %162 = arith.mulf %161, %157 : vector<8x128xf32>
      %cst_35 = arith.constant -0.0170881264 : f32
      %163 = vector.broadcast %cst_35 : f32 to vector<8x128xf32>
      %164 = arith.addf %162, %163 : vector<8x128xf32>
      %165 = arith.mulf %164, %157 : vector<8x128xf32>
      %cst_36 = arith.constant 0.0308918804 : f32
      %166 = vector.broadcast %cst_36 : f32 to vector<8x128xf32>
      %167 = arith.addf %165, %166 : vector<8x128xf32>
      %168 = arith.mulf %167, %157 : vector<8x128xf32>
      %cst_37 = arith.constant -0.0501743034 : f32
      %169 = vector.broadcast %cst_37 : f32 to vector<8x128xf32>
      %170 = arith.addf %168, %169 : vector<8x128xf32>
      %171 = arith.mulf %170, %157 : vector<8x128xf32>
      %cst_38 = arith.constant 0.0889789909 : f32
      %172 = vector.broadcast %cst_38 : f32 to vector<8x128xf32>
      %173 = arith.addf %171, %172 : vector<8x128xf32>
      %174 = arith.mulf %173, %157 : vector<8x128xf32>
      %cst_39 = arith.constant -0.214598805 : f32
      %175 = vector.broadcast %cst_39 : f32 to vector<8x128xf32>
      %176 = arith.addf %174, %175 : vector<8x128xf32>
      %177 = arith.mulf %176, %157 : vector<8x128xf32>
      %cst_40 = arith.constant 1.57079625 : f32
      %178 = vector.broadcast %cst_40 : f32 to vector<8x128xf32>
      %179 = arith.addf %177, %178 : vector<8x128xf32>
      %cst_41 = arith.constant 1.000000e+00 : f32
      %180 = vector.broadcast %cst_41 : f32 to vector<8x128xf32>
      %181 = arith.subf %180, %157 : vector<8x128xf32>
      %cst_42 = arith.constant 0.000000e+00 : f32
      %182 = vector.broadcast %cst_42 : f32 to vector<8x128xf32>
      %183 = arith.maximumf %181, %182 : vector<8x128xf32>
      %184 = math.sqrt %183 : vector<8x128xf32>
      %185 = arith.mulf %184, %179 : vector<8x128xf32>
      %cst_43 = arith.constant 0.000000e+00 : f32
      %186 = vector.broadcast %cst_43 : f32 to vector<8x128xf32>
      %187 = arith.cmpf olt, %156, %186 : vector<8x128xf32>
      %cst_44 = arith.constant 3.14159274 : f32
      %188 = vector.broadcast %cst_44 : f32 to vector<8x128xf32>
      %189 = arith.subf %188, %185 : vector<8x128xf32>
      %190 = arith.select %187, %189, %185 : vector<8x128xi1>, vector<8x128xf32>
      %cst_45 = arith.constant 9.99999997E-7 : f32
      %191 = vector.broadcast %cst_45 : f32 to vector<8x128xf32>
      %192 = arith.addf %190, %191 : vector<8x128xf32>
      %193 = arith.mulf %156, %156 : vector<8x128xf32>
      %cst_46 = arith.constant 1.000000e+00 : f32
      %194 = vector.broadcast %cst_46 : f32 to vector<8x128xf32>
      %195 = arith.subf %194, %193 : vector<8x128xf32>
      %cst_47 = arith.constant 9.99999996E-13 : f32
      %196 = vector.broadcast %cst_47 : f32 to vector<8x128xf32>
      %197 = arith.maximumf %195, %196 : vector<8x128xf32>
      %198 = math.sqrt %197 : vector<8x128xf32>
      %cst_48 = arith.constant 2.000000e+00 : f32
      %199 = vector.broadcast %cst_48 : f32 to vector<8x128xf32>
      %200 = arith.mulf %199, %198 : vector<8x128xf32>
      %201 = tpu.reciprocal %200 {approx = true} : vector<8x128xf32> -> vector<8x128xf32>
      %202 = arith.mulf %192, %201 : vector<8x128xf32>
      %cst_49 = arith.constant 1.000000e+00 : f32
      %203 = vector.broadcast %cst_49 : f32 to vector<8x128xf32>
      %204 = arith.subf %203, %156 : vector<8x128xf32>
      %cst_50 = arith.constant 2.000000e+00 : f32
      %205 = vector.broadcast %cst_50 : f32 to vector<8x128xf32>
      %206 = arith.mulf %205, %204 : vector<8x128xf32>
      %207 = tpu.reciprocal %206 {approx = true} : vector<8x128xf32> -> vector<8x128xf32>
      %208 = arith.mulf %198, %207 : vector<8x128xf32>
      %209 = arith.mulf %192, %208 : vector<8x128xf32>
      %cst_51 = arith.constant 1.000000e+00 : f32
      %210 = vector.broadcast %cst_51 : f32 to vector<8x128xf32>
      %211 = arith.subf %210, %209 : vector<8x128xf32>
      %212 = arith.mulf %192, %192 : vector<8x128xf32>
      %213 = tpu.reciprocal %212 {approx = true} : vector<8x128xf32> -> vector<8x128xf32>
      %214 = arith.mulf %211, %213 : vector<8x128xf32>
      %215 = arith.subf %135, %119 : vector<8x128xf32>
      %216 = arith.mulf %202, %215 : vector<8x128xf32>
      %217 = arith.subf %98, %130 : vector<8x128xf32>
      %218 = arith.mulf %202, %217 : vector<8x128xf32>
      %219 = arith.subf %109, %93 : vector<8x128xf32>
      %220 = arith.mulf %202, %219 : vector<8x128xf32>
      %221 = arith.mulf %216, %216 : vector<8x128xf32>
      %222 = arith.mulf %218, %218 : vector<8x128xf32>
      %223 = arith.mulf %220, %220 : vector<8x128xf32>
      %224 = arith.mulf %216, %218 : vector<8x128xf32>
      %225 = arith.mulf %216, %220 : vector<8x128xf32>
      %226 = arith.mulf %218, %220 : vector<8x128xf32>
      %cst_52 = arith.constant 0.000000e+00 : f32
      %227 = vector.broadcast %cst_52 : f32 to vector<8x128xf32>
      %228 = arith.subf %227, %220 : vector<8x128xf32>
      %cst_53 = arith.constant 0.000000e+00 : f32
      %229 = vector.broadcast %cst_53 : f32 to vector<8x128xf32>
      %230 = arith.subf %229, %216 : vector<8x128xf32>
      %cst_54 = arith.constant 0.000000e+00 : f32
      %231 = vector.broadcast %cst_54 : f32 to vector<8x128xf32>
      %232 = arith.subf %231, %218 : vector<8x128xf32>
      %233 = arith.addf %222, %223 : vector<8x128xf32>
      %cst_55 = arith.constant 0.000000e+00 : f32
      %234 = vector.broadcast %cst_55 : f32 to vector<8x128xf32>
      %235 = arith.subf %234, %233 : vector<8x128xf32>
      %236 = arith.addf %221, %223 : vector<8x128xf32>
      %cst_56 = arith.constant 0.000000e+00 : f32
      %237 = vector.broadcast %cst_56 : f32 to vector<8x128xf32>
      %238 = arith.subf %237, %236 : vector<8x128xf32>
      %239 = arith.addf %221, %222 : vector<8x128xf32>
      %cst_57 = arith.constant 0.000000e+00 : f32
      %240 = vector.broadcast %cst_57 : f32 to vector<8x128xf32>
      %241 = arith.subf %240, %239 : vector<8x128xf32>
      %242 = arith.mulf %214, %235 : vector<8x128xf32>
      %cst_58 = arith.constant 1.000000e+00 : f32
      %243 = vector.broadcast %cst_58 : f32 to vector<8x128xf32>
      %244 = arith.addf %243, %242 : vector<8x128xf32>
      %cst_59 = arith.constant 5.000000e-01 : f32
      %245 = vector.broadcast %cst_59 : f32 to vector<8x128xf32>
      %246 = arith.mulf %245, %228 : vector<8x128xf32>
      %cst_60 = arith.constant 0.000000e+00 : f32
      %247 = vector.broadcast %cst_60 : f32 to vector<8x128xf32>
      %248 = arith.subf %247, %246 : vector<8x128xf32>
      %249 = arith.mulf %214, %224 : vector<8x128xf32>
      %250 = arith.addf %248, %249 : vector<8x128xf32>
      %cst_61 = arith.constant 5.000000e-01 : f32
      %251 = vector.broadcast %cst_61 : f32 to vector<8x128xf32>
      %252 = arith.mulf %251, %218 : vector<8x128xf32>
      %cst_62 = arith.constant 0.000000e+00 : f32
      %253 = vector.broadcast %cst_62 : f32 to vector<8x128xf32>
      %254 = arith.subf %253, %252 : vector<8x128xf32>
      %255 = arith.mulf %214, %225 : vector<8x128xf32>
      %256 = arith.addf %254, %255 : vector<8x128xf32>
      %cst_63 = arith.constant 5.000000e-01 : f32
      %257 = vector.broadcast %cst_63 : f32 to vector<8x128xf32>
      %258 = arith.mulf %257, %220 : vector<8x128xf32>
      %cst_64 = arith.constant 0.000000e+00 : f32
      %259 = vector.broadcast %cst_64 : f32 to vector<8x128xf32>
      %260 = arith.subf %259, %258 : vector<8x128xf32>
      %261 = arith.mulf %214, %224 : vector<8x128xf32>
      %262 = arith.addf %260, %261 : vector<8x128xf32>
      %263 = arith.mulf %214, %238 : vector<8x128xf32>
      %cst_65 = arith.constant 1.000000e+00 : f32
      %264 = vector.broadcast %cst_65 : f32 to vector<8x128xf32>
      %265 = arith.addf %264, %263 : vector<8x128xf32>
      %cst_66 = arith.constant 5.000000e-01 : f32
      %266 = vector.broadcast %cst_66 : f32 to vector<8x128xf32>
      %267 = arith.mulf %266, %230 : vector<8x128xf32>
      %cst_67 = arith.constant 0.000000e+00 : f32
      %268 = vector.broadcast %cst_67 : f32 to vector<8x128xf32>
      %269 = arith.subf %268, %267 : vector<8x128xf32>
      %270 = arith.mulf %214, %226 : vector<8x128xf32>
      %271 = arith.addf %269, %270 : vector<8x128xf32>
      %cst_68 = arith.constant 5.000000e-01 : f32
      %272 = vector.broadcast %cst_68 : f32 to vector<8x128xf32>
      %273 = arith.mulf %272, %232 : vector<8x128xf32>
      %cst_69 = arith.constant 0.000000e+00 : f32
      %274 = vector.broadcast %cst_69 : f32 to vector<8x128xf32>
      %275 = arith.subf %274, %273 : vector<8x128xf32>
      %276 = arith.mulf %214, %225 : vector<8x128xf32>
      %277 = arith.addf %275, %276 : vector<8x128xf32>
      %cst_70 = arith.constant 5.000000e-01 : f32
      %278 = vector.broadcast %cst_70 : f32 to vector<8x128xf32>
      %279 = arith.mulf %278, %216 : vector<8x128xf32>
      %cst_71 = arith.constant 0.000000e+00 : f32
      %280 = vector.broadcast %cst_71 : f32 to vector<8x128xf32>
      %281 = arith.subf %280, %279 : vector<8x128xf32>
      %282 = arith.mulf %214, %226 : vector<8x128xf32>
      %283 = arith.addf %281, %282 : vector<8x128xf32>
      %284 = arith.mulf %214, %241 : vector<8x128xf32>
      %cst_72 = arith.constant 1.000000e+00 : f32
      %285 = vector.broadcast %cst_72 : f32 to vector<8x128xf32>
      %286 = arith.addf %285, %284 : vector<8x128xf32>
      %287 = arith.mulf %244, %104 : vector<8x128xf32>
      %288 = arith.mulf %250, %125 : vector<8x128xf32>
      %289 = arith.addf %287, %288 : vector<8x128xf32>
      %290 = arith.mulf %256, %146 : vector<8x128xf32>
      %291 = arith.addf %289, %290 : vector<8x128xf32>
      %292 = arith.mulf %262, %104 : vector<8x128xf32>
      %293 = arith.mulf %265, %125 : vector<8x128xf32>
      %294 = arith.addf %292, %293 : vector<8x128xf32>
      %295 = arith.mulf %271, %146 : vector<8x128xf32>
      %296 = arith.addf %294, %295 : vector<8x128xf32>
      %297 = arith.mulf %277, %104 : vector<8x128xf32>
      %298 = arith.mulf %283, %125 : vector<8x128xf32>
      %299 = arith.addf %297, %298 : vector<8x128xf32>
      %300 = arith.mulf %286, %146 : vector<8x128xf32>
      %301 = arith.addf %299, %300 : vector<8x128xf32>
      %cst_73 = arith.constant 0.000000e+00 : f32
      %302 = vector.broadcast %cst_73 : f32 to vector<8x128xf32>
      %c24 = arith.constant 24 : index
      %303 = arith.index_cast %11 : i32 to index
      %c0_74 = arith.constant 0 : index
      %304 = vector.load %arg1[%c24, %303, %c0_74] : memref<30x8x128xf32, #tpu.memory_space<vmem>>, vector<1x8x128xf32>
      %305 = vector.shape_cast %304 : vector<1x8x128xf32> to vector<8x128xf32>
      %306 = arith.subf %216, %305 : vector<8x128xf32>
      %307 = arith.mulf %306, %306 : vector<8x128xf32>
      %cst_75 = arith.constant 9.99999997E-7 : f32
      %308 = vector.broadcast %cst_75 : f32 to vector<8x128xf32>
      %309 = arith.addf %307, %308 : vector<8x128xf32>
      %310 = math.sqrt %309 : vector<8x128xf32>
      %311 = arith.addf %302, %310 : vector<8x128xf32>
      %c25 = arith.constant 25 : index
      %312 = arith.index_cast %11 : i32 to index
      %c0_76 = arith.constant 0 : index
      %313 = vector.load %arg1[%c25, %312, %c0_76] : memref<30x8x128xf32, #tpu.memory_space<vmem>>, vector<1x8x128xf32>
      %314 = vector.shape_cast %313 : vector<1x8x128xf32> to vector<8x128xf32>
      %315 = arith.subf %218, %314 : vector<8x128xf32>
      %316 = arith.mulf %315, %315 : vector<8x128xf32>
      %cst_77 = arith.constant 9.99999997E-7 : f32
      %317 = vector.broadcast %cst_77 : f32 to vector<8x128xf32>
      %318 = arith.addf %316, %317 : vector<8x128xf32>
      %319 = math.sqrt %318 : vector<8x128xf32>
      %320 = arith.addf %311, %319 : vector<8x128xf32>
      %c26 = arith.constant 26 : index
      %321 = arith.index_cast %11 : i32 to index
      %c0_78 = arith.constant 0 : index
      %322 = vector.load %arg1[%c26, %321, %c0_78] : memref<30x8x128xf32, #tpu.memory_space<vmem>>, vector<1x8x128xf32>
      %323 = vector.shape_cast %322 : vector<1x8x128xf32> to vector<8x128xf32>
      %324 = arith.subf %220, %323 : vector<8x128xf32>
      %325 = arith.mulf %324, %324 : vector<8x128xf32>
      %cst_79 = arith.constant 9.99999997E-7 : f32
      %326 = vector.broadcast %cst_79 : f32 to vector<8x128xf32>
      %327 = arith.addf %325, %326 : vector<8x128xf32>
      %328 = math.sqrt %327 : vector<8x128xf32>
      %329 = arith.addf %320, %328 : vector<8x128xf32>
      %c27 = arith.constant 27 : index
      %330 = arith.index_cast %11 : i32 to index
      %c0_80 = arith.constant 0 : index
      %331 = vector.load %arg1[%c27, %330, %c0_80] : memref<30x8x128xf32, #tpu.memory_space<vmem>>, vector<1x8x128xf32>
      %332 = vector.shape_cast %331 : vector<1x8x128xf32> to vector<8x128xf32>
      %333 = arith.subf %291, %332 : vector<8x128xf32>
      %334 = arith.mulf %333, %333 : vector<8x128xf32>
      %cst_81 = arith.constant 9.99999997E-7 : f32
      %335 = vector.broadcast %cst_81 : f32 to vector<8x128xf32>
      %336 = arith.addf %334, %335 : vector<8x128xf32>
      %337 = math.sqrt %336 : vector<8x128xf32>
      %338 = arith.addf %329, %337 : vector<8x128xf32>
      %c28 = arith.constant 28 : index
      %339 = arith.index_cast %11 : i32 to index
      %c0_82 = arith.constant 0 : index
      %340 = vector.load %arg1[%c28, %339, %c0_82] : memref<30x8x128xf32, #tpu.memory_space<vmem>>, vector<1x8x128xf32>
      %341 = vector.shape_cast %340 : vector<1x8x128xf32> to vector<8x128xf32>
      %342 = arith.subf %296, %341 : vector<8x128xf32>
      %343 = arith.mulf %342, %342 : vector<8x128xf32>
      %cst_83 = arith.constant 9.99999997E-7 : f32
      %344 = vector.broadcast %cst_83 : f32 to vector<8x128xf32>
      %345 = arith.addf %343, %344 : vector<8x128xf32>
      %346 = math.sqrt %345 : vector<8x128xf32>
      %347 = arith.addf %338, %346 : vector<8x128xf32>
      %c29 = arith.constant 29 : index
      %348 = arith.index_cast %11 : i32 to index
      %c0_84 = arith.constant 0 : index
      %349 = vector.load %arg1[%c29, %348, %c0_84] : memref<30x8x128xf32, #tpu.memory_space<vmem>>, vector<1x8x128xf32>
      %350 = vector.shape_cast %349 : vector<1x8x128xf32> to vector<8x128xf32>
      %351 = arith.subf %301, %350 : vector<8x128xf32>
      %352 = arith.mulf %351, %351 : vector<8x128xf32>
      %cst_85 = arith.constant 9.99999997E-7 : f32
      %353 = vector.broadcast %cst_85 : f32 to vector<8x128xf32>
      %354 = arith.addf %352, %353 : vector<8x128xf32>
      %355 = math.sqrt %354 : vector<8x128xf32>
      %356 = arith.addf %347, %355 : vector<8x128xf32>
      %357 = arith.addf %1, %356 : vector<8x128xf32>
      %c1_i32 = arith.constant 1 : i32
      %c0_86 = arith.constant 0 : index
      %c0_87 = arith.constant 0 : index
      %358 = vector.load %arg2[%c0_86, %c0_87] : memref<8x128xf32, #tpu.memory_space<vmem>>, vector<8x128xf32>
      tpu.vector_store %arg2[%c0_86, %c0_87], %357 {strides = array<i32>} : memref<8x128xf32, #tpu.memory_space<vmem>>, vector<8x128xf32>,
    } else {
    }
    %c1024_i32_1 = arith.constant 1024 : i32
    %6 = arith.addi %0, %c1024_i32_1 : i32
    %c10_i32_2 = arith.constant 10 : i32
    %7 = arith.cmpi sgt, %6, %c10_i32_2 : i32
    %8 = arith.extui %7 : i1 to i32
    %c0_i32_3 = arith.constant 0 : i32
    %9 = arith.cmpi ne, %8, %c0_i32_3 : i32
    scf.if %9 {
      %10 = tpu.iota {dimensions = array<i32: 0>} : vector<8x128xi32>
      %11 = tpu.iota {dimensions = array<i32: 1>} : vector<8x128xi32>
      %c128_i32 = arith.constant 128 : i32
      %12 = vector.broadcast %c128_i32 : i32 to vector<8x128xi32>
      %13 = arith.muli %10, %12 : vector<8x128xi32>
      %14 = arith.addi %13, %11 : vector<8x128xi32>
      %c0_i32_4 = arith.constant 0 : i32
      %c8_i32 = arith.constant 8 : i32
      %15 = arith.muli %c0_i32_4, %c8_i32 : i32
      %16 = tpu.assume_multiple %15, 8 : i32
      %c0 = arith.constant 0 : index
      %17 = arith.index_cast %16 : i32 to index
      %c0_5 = arith.constant 0 : index
      %18 = vector.load %arg1[%c0, %17, %c0_5] : memref<30x8x128xf32, #tpu.memory_space<vmem>>, vector<1x8x128xf32>
      %19 = vector.shape_cast %18 : vector<1x8x128xf32> to vector<8x128xf32>
      %c1 = arith.constant 1 : index
      %20 = arith.index_cast %16 : i32 to index
      %c0_6 = arith.constant 0 : index
      %21 = vector.load %arg1[%c1, %20, %c0_6] : memref<30x8x128xf32, #tpu.memory_space<vmem>>, vector<1x8x128xf32>
      %22 = vector.shape_cast %21 : vector<1x8x128xf32> to vector<8x128xf32>
      %c2 = arith.constant 2 : index
      %23 = arith.index_cast %16 : i32 to index
      %c0_7 = arith.constant 0 : index
      %24 = vector.load %arg1[%c2, %23, %c0_7] : memref<30x8x128xf32, #tpu.memory_space<vmem>>, vector<1x8x128xf32>
      %25 = vector.shape_cast %24 : vector<1x8x128xf32> to vector<8x128xf32>
      %c3 = arith.constant 3 : index
      %26 = arith.index_cast %16 : i32 to index
      %c0_8 = arith.constant 0 : index
      %27 = vector.load %arg1[%c3, %26, %c0_8] : memref<30x8x128xf32, #tpu.memory_space<vmem>>, vector<1x8x128xf32>
      %28 = vector.shape_cast %27 : vector<1x8x128xf32> to vector<8x128xf32>
      %c4 = arith.constant 4 : index
      %29 = arith.index_cast %16 : i32 to index
      %c0_9 = arith.constant 0 : index
      %30 = vector.load %arg1[%c4, %29, %c0_9] : memref<30x8x128xf32, #tpu.memory_space<vmem>>, vector<1x8x128xf32>
      %31 = vector.shape_cast %30 : vector<1x8x128xf32> to vector<8x128xf32>
      %c5 = arith.constant 5 : index
      %32 = arith.index_cast %16 : i32 to index
      %c0_10 = arith.constant 0 : index
      %33 = vector.load %arg1[%c5, %32, %c0_10] : memref<30x8x128xf32, #tpu.memory_space<vmem>>, vector<1x8x128xf32>
      %34 = vector.shape_cast %33 : vector<1x8x128xf32> to vector<8x128xf32>
      %c6 = arith.constant 6 : index
      %35 = arith.index_cast %16 : i32 to index
      %c0_11 = arith.constant 0 : index
      %36 = vector.load %arg1[%c6, %35, %c0_11] : memref<30x8x128xf32, #tpu.memory_space<vmem>>, vector<1x8x128xf32>
      %37 = vector.shape_cast %36 : vector<1x8x128xf32> to vector<8x128xf32>
      %c7 = arith.constant 7 : index
      %38 = arith.index_cast %16 : i32 to index
      %c0_12 = arith.constant 0 : index
      %39 = vector.load %arg1[%c7, %38, %c0_12] : memref<30x8x128xf32, #tpu.memory_space<vmem>>, vector<1x8x128xf32>
      %40 = vector.shape_cast %39 : vector<1x8x128xf32> to vector<8x128xf32>
      %c8 = arith.constant 8 : index
      %41 = arith.index_cast %16 : i32 to index
      %c0_13 = arith.constant 0 : index
      %42 = vector.load %arg1[%c8, %41, %c0_13] : memref<30x8x128xf32, #tpu.memory_space<vmem>>, vector<1x8x128xf32>
      %43 = vector.shape_cast %42 : vector<1x8x128xf32> to vector<8x128xf32>
      %c9 = arith.constant 9 : index
      %44 = arith.index_cast %16 : i32 to index
      %c0_14 = arith.constant 0 : index
      %45 = vector.load %arg1[%c9, %44, %c0_14] : memref<30x8x128xf32, #tpu.memory_space<vmem>>, vector<1x8x128xf32>
      %46 = vector.shape_cast %45 : vector<1x8x128xf32> to vector<8x128xf32>
      %c10 = arith.constant 10 : index
      %47 = arith.index_cast %16 : i32 to index
      %c0_15 = arith.constant 0 : index
      %48 = vector.load %arg1[%c10, %47, %c0_15] : memref<30x8x128xf32, #tpu.memory_space<vmem>>, vector<1x8x128xf32>
      %49 = vector.shape_cast %48 : vector<1x8x128xf32> to vector<8x128xf32>
      %c11 = arith.constant 11 : index
      %50 = arith.index_cast %16 : i32 to index
      %c0_16 = arith.constant 0 : index
      %51 = vector.load %arg1[%c11, %50, %c0_16] : memref<30x8x128xf32, #tpu.memory_space<vmem>>, vector<1x8x128xf32>
      %52 = vector.shape_cast %51 : vector<1x8x128xf32> to vector<8x128xf32>
      %c12 = arith.constant 12 : index
      %53 = arith.index_cast %16 : i32 to index
      %c0_17 = arith.constant 0 : index
      %54 = vector.load %arg1[%c12, %53, %c0_17] : memref<30x8x128xf32, #tpu.memory_space<vmem>>, vector<1x8x128xf32>
      %55 = vector.shape_cast %54 : vector<1x8x128xf32> to vector<8x128xf32>
      %c13 = arith.constant 13 : index
      %56 = arith.index_cast %16 : i32 to index
      %c0_18 = arith.constant 0 : index
      %57 = vector.load %arg1[%c13, %56, %c0_18] : memref<30x8x128xf32, #tpu.memory_space<vmem>>, vector<1x8x128xf32>
      %58 = vector.shape_cast %57 : vector<1x8x128xf32> to vector<8x128xf32>
      %c14 = arith.constant 14 : index
      %59 = arith.index_cast %16 : i32 to index
      %c0_19 = arith.constant 0 : index
      %60 = vector.load %arg1[%c14, %59, %c0_19] : memref<30x8x128xf32, #tpu.memory_space<vmem>>, vector<1x8x128xf32>
      %61 = vector.shape_cast %60 : vector<1x8x128xf32> to vector<8x128xf32>
      %c15 = arith.constant 15 : index
      %62 = arith.index_cast %16 : i32 to index
      %c0_20 = arith.constant 0 : index
      %63 = vector.load %arg1[%c15, %62, %c0_20] : memref<30x8x128xf32, #tpu.memory_space<vmem>>, vector<1x8x128xf32>
      %64 = vector.shape_cast %63 : vector<1x8x128xf32> to vector<8x128xf32>
      %c16 = arith.constant 16 : index
      %65 = arith.index_cast %16 : i32 to index
      %c0_21 = arith.constant 0 : index
      %66 = vector.load %arg1[%c16, %65, %c0_21] : memref<30x8x128xf32, #tpu.memory_space<vmem>>, vector<1x8x128xf32>
      %67 = vector.shape_cast %66 : vector<1x8x128xf32> to vector<8x128xf32>
      %c17 = arith.constant 17 : index
      %68 = arith.index_cast %16 : i32 to index
      %c0_22 = arith.constant 0 : index
      %69 = vector.load %arg1[%c17, %68, %c0_22] : memref<30x8x128xf32, #tpu.memory_space<vmem>>, vector<1x8x128xf32>
      %70 = vector.shape_cast %69 : vector<1x8x128xf32> to vector<8x128xf32>
      %c18 = arith.constant 18 : index
      %71 = arith.index_cast %16 : i32 to index
      %c0_23 = arith.constant 0 : index
      %72 = vector.load %arg1[%c18, %71, %c0_23] : memref<30x8x128xf32, #tpu.memory_space<vmem>>, vector<1x8x128xf32>
      %73 = vector.shape_cast %72 : vector<1x8x128xf32> to vector<8x128xf32>
      %c19 = arith.constant 19 : index
      %74 = arith.index_cast %16 : i32 to index
      %c0_24 = arith.constant 0 : index
      %75 = vector.load %arg1[%c19, %74, %c0_24] : memref<30x8x128xf32, #tpu.memory_space<vmem>>, vector<1x8x128xf32>
      %76 = vector.shape_cast %75 : vector<1x8x128xf32> to vector<8x128xf32>
      %c20 = arith.constant 20 : index
      %77 = arith.index_cast %16 : i32 to index
      %c0_25 = arith.constant 0 : index
      %78 = vector.load %arg1[%c20, %77, %c0_25] : memref<30x8x128xf32, #tpu.memory_space<vmem>>, vector<1x8x128xf32>
      %79 = vector.shape_cast %78 : vector<1x8x128xf32> to vector<8x128xf32>
      %c21 = arith.constant 21 : index
      %80 = arith.index_cast %16 : i32 to index
      %c0_26 = arith.constant 0 : index
      %81 = vector.load %arg1[%c21, %80, %c0_26] : memref<30x8x128xf32, #tpu.memory_space<vmem>>, vector<1x8x128xf32>
      %82 = vector.shape_cast %81 : vector<1x8x128xf32> to vector<8x128xf32>
      %c22 = arith.constant 22 : index
      %83 = arith.index_cast %16 : i32 to index
      %c0_27 = arith.constant 0 : index
      %84 = vector.load %arg1[%c22, %83, %c0_27] : memref<30x8x128xf32, #tpu.memory_space<vmem>>, vector<1x8x128xf32>
      %85 = vector.shape_cast %84 : vector<1x8x128xf32> to vector<8x128xf32>
      %c23 = arith.constant 23 : index
      %86 = arith.index_cast %16 : i32 to index
      %c0_28 = arith.constant 0 : index
      %87 = vector.load %arg1[%c23, %86, %c0_28] : memref<30x8x128xf32, #tpu.memory_space<vmem>>, vector<1x8x128xf32>
      %88 = vector.shape_cast %87 : vector<1x8x128xf32> to vector<8x128xf32>
      %89 = arith.mulf %19, %55 : vector<8x128xf32>
      %90 = arith.mulf %22, %67 : vector<8x128xf32>
      %91 = arith.addf %89, %90 : vector<8x128xf32>
      %92 = arith.mulf %25, %79 : vector<8x128xf32>
      %93 = arith.addf %91, %92 : vector<8x128xf32>
      %94 = arith.mulf %19, %58 : vector<8x128xf32>
      %95 = arith.mulf %22, %70 : vector<8x128xf32>
      %96 = arith.addf %94, %95 : vector<8x128xf32>
      %97 = arith.mulf %25, %82 : vector<8x128xf32>
      %98 = arith.addf %96, %97 : vector<8x128xf32>
      %99 = arith.mulf %19, %61 : vector<8x128xf32>
      %100 = arith.mulf %22, %73 : vector<8x128xf32>
      %101 = arith.addf %99, %100 : vector<8x128xf32>
      %102 = arith.mulf %25, %85 : vector<8x128xf32>
      %103 = arith.addf %101, %102 : vector<8x128xf32>
      %104 = arith.mulf %19, %64 : vector<8x128xf32>
      %105 = arith.mulf %22, %76 : vector<8x128xf32>
      %106 = arith.addf %104, %105 : vector<8x128xf32>
      %107 = arith.mulf %25, %88 : vector<8x128xf32>
      %108 = arith.addf %106, %107 : vector<8x128xf32>
      %109 = arith.addf %108, %28 : vector<8x128xf32>
      %110 = arith.mulf %31, %55 : vector<8x128xf32>
      %111 = arith.mulf %34, %67 : vector<8x128xf32>
      %112 = arith.addf %110, %111 : vector<8x128xf32>
      %113 = arith.mulf %37, %79 : vector<8x128xf32>
      %114 = arith.addf %112, %113 : vector<8x128xf32>
      %115 = arith.mulf %31, %58 : vector<8x128xf32>
      %116 = arith.mulf %34, %70 : vector<8x128xf32>
      %117 = arith.addf %115, %116 : vector<8x128xf32>
      %118 = arith.mulf %37, %82 : vector<8x128xf32>
      %119 = arith.addf %117, %118 : vector<8x128xf32>
      %120 = arith.mulf %31, %61 : vector<8x128xf32>
      %121 = arith.mulf %34, %73 : vector<8x128xf32>
      %122 = arith.addf %120, %121 : vector<8x128xf32>
      %123 = arith.mulf %37, %85 : vector<8x128xf32>
      %124 = arith.addf %122, %123 : vector<8x128xf32>
      %125 = arith.mulf %31, %64 : vector<8x128xf32>
      %126 = arith.mulf %34, %76 : vector<8x128xf32>
      %127 = arith.addf %125, %126 : vector<8x128xf32>
      %128 = arith.mulf %37, %88 : vector<8x128xf32>
      %129 = arith.addf %127, %128 : vector<8x128xf32>
      %130 = arith.addf %129, %40 : vector<8x128xf32>
      %131 = arith.mulf %43, %55 : vector<8x128xf32>
      %132 = arith.mulf %46, %67 : vector<8x128xf32>
      %133 = arith.addf %131, %132 : vector<8x128xf32>
      %134 = arith.mulf %49, %79 : vector<8x128xf32>
      %135 = arith.addf %133, %134 : vector<8x128xf32>
      %136 = arith.mulf %43, %58 : vector<8x128xf32>
      %137 = arith.mulf %46, %70 : vector<8x128xf32>
      %138 = arith.addf %136, %137 : vector<8x128xf32>
      %139 = arith.mulf %49, %82 : vector<8x128xf32>
      %140 = arith.addf %138, %139 : vector<8x128xf32>
      %141 = arith.mulf %43, %61 : vector<8x128xf32>
      %142 = arith.mulf %46, %73 : vector<8x128xf32>
      %143 = arith.addf %141, %142 : vector<8x128xf32>
      %144 = arith.mulf %49, %85 : vector<8x128xf32>
      %145 = arith.addf %143, %144 : vector<8x128xf32>
      %146 = arith.mulf %43, %64 : vector<8x128xf32>
      %147 = arith.mulf %46, %76 : vector<8x128xf32>
      %148 = arith.addf %146, %147 : vector<8x128xf32>
      %149 = arith.mulf %49, %88 : vector<8x128xf32>
      %150 = arith.addf %148, %149 : vector<8x128xf32>
      %151 = arith.addf %150, %52 : vector<8x128xf32>
      %152 = arith.addf %93, %119 : vector<8x128xf32>
      %153 = arith.addf %152, %145 : vector<8x128xf32>
      %cst_29 = arith.constant 1.000000e+00 : f32
      %154 = vector.broadcast %cst_29 : f32 to vector<8x128xf32>
      %155 = arith.subf %153, %154 : vector<8x128xf32>
      %cst_30 = arith.constant 5.000000e-01 : f32
      %156 = vector.broadcast %cst_30 : f32 to vector<8x128xf32>
      %157 = arith.mulf %155, %156 : vector<8x128xf32>
      %cst_31 = arith.constant -0.999998986 : f32
      %cst_32 = arith.constant 0.999998986 : f32
      %158 = vector.broadcast %cst_31 : f32 to vector<8x128xf32>
      %159 = arith.maximumf %158, %157 : vector<8x128xf32>
      %160 = vector.broadcast %cst_32 : f32 to vector<8x128xf32>
      %161 = arith.minimumf %160, %159 : vector<8x128xf32>
      %162 = math.absf %161 : vector<8x128xf32>
      %cst_33 = arith.constant -0.0012624911 : f32
      %163 = vector.broadcast %cst_33 : f32 to vector<8x128xf32>
      %164 = arith.mulf %163, %162 : vector<8x128xf32>
      %cst_34 = arith.constant 6.670090e-03 : f32
      %165 = vector.broadcast %cst_34 : f32 to vector<8x128xf32>
      %166 = arith.addf %164, %165 : vector<8x128xf32>
      %167 = arith.mulf %166, %162 : vector<8x128xf32>
      %cst_35 = arith.constant -0.0170881264 : f32
      %168 = vector.broadcast %cst_35 : f32 to vector<8x128xf32>
      %169 = arith.addf %167, %168 : vector<8x128xf32>
      %170 = arith.mulf %169, %162 : vector<8x128xf32>
      %cst_36 = arith.constant 0.0308918804 : f32
      %171 = vector.broadcast %cst_36 : f32 to vector<8x128xf32>
      %172 = arith.addf %170, %171 : vector<8x128xf32>
      %173 = arith.mulf %172, %162 : vector<8x128xf32>
      %cst_37 = arith.constant -0.0501743034 : f32
      %174 = vector.broadcast %cst_37 : f32 to vector<8x128xf32>
      %175 = arith.addf %173, %174 : vector<8x128xf32>
      %176 = arith.mulf %175, %162 : vector<8x128xf32>
      %cst_38 = arith.constant 0.0889789909 : f32
      %177 = vector.broadcast %cst_38 : f32 to vector<8x128xf32>
      %178 = arith.addf %176, %177 : vector<8x128xf32>
      %179 = arith.mulf %178, %162 : vector<8x128xf32>
      %cst_39 = arith.constant -0.214598805 : f32
      %180 = vector.broadcast %cst_39 : f32 to vector<8x128xf32>
      %181 = arith.addf %179, %180 : vector<8x128xf32>
      %182 = arith.mulf %181, %162 : vector<8x128xf32>
      %cst_40 = arith.constant 1.57079625 : f32
      %183 = vector.broadcast %cst_40 : f32 to vector<8x128xf32>
      %184 = arith.addf %182, %183 : vector<8x128xf32>
      %cst_41 = arith.constant 1.000000e+00 : f32
      %185 = vector.broadcast %cst_41 : f32 to vector<8x128xf32>
      %186 = arith.subf %185, %162 : vector<8x128xf32>
      %cst_42 = arith.constant 0.000000e+00 : f32
      %187 = vector.broadcast %cst_42 : f32 to vector<8x128xf32>
      %188 = arith.maximumf %186, %187 : vector<8x128xf32>
      %189 = math.sqrt %188 : vector<8x128xf32>
      %190 = arith.mulf %189, %184 : vector<8x128xf32>
      %cst_43 = arith.constant 0.000000e+00 : f32
      %191 = vector.broadcast %cst_43 : f32 to vector<8x128xf32>
      %192 = arith.cmpf olt, %161, %191 : vector<8x128xf32>
      %cst_44 = arith.constant 3.14159274 : f32
      %193 = vector.broadcast %cst_44 : f32 to vector<8x128xf32>
      %194 = arith.subf %193, %190 : vector<8x128xf32>
      %195 = arith.select %192, %194, %190 : vector<8x128xi1>, vector<8x128xf32>
      %cst_45 = arith.constant 9.99999997E-7 : f32
      %196 = vector.broadcast %cst_45 : f32 to vector<8x128xf32>
      %197 = arith.addf %195, %196 : vector<8x128xf32>
      %198 = arith.mulf %161, %161 : vector<8x128xf32>
      %cst_46 = arith.constant 1.000000e+00 : f32
      %199 = vector.broadcast %cst_46 : f32 to vector<8x128xf32>
      %200 = arith.subf %199, %198 : vector<8x128xf32>
      %cst_47 = arith.constant 9.99999996E-13 : f32
      %201 = vector.broadcast %cst_47 : f32 to vector<8x128xf32>
      %202 = arith.maximumf %200, %201 : vector<8x128xf32>
      %203 = math.sqrt %202 : vector<8x128xf32>
      %cst_48 = arith.constant 2.000000e+00 : f32
      %204 = vector.broadcast %cst_48 : f32 to vector<8x128xf32>
      %205 = arith.mulf %204, %203 : vector<8x128xf32>
      %206 = tpu.reciprocal %205 {approx = true} : vector<8x128xf32> -> vector<8x128xf32>
      %207 = arith.mulf %197, %206 : vector<8x128xf32>
      %cst_49 = arith.constant 1.000000e+00 : f32
      %208 = vector.broadcast %cst_49 : f32 to vector<8x128xf32>
      %209 = arith.subf %208, %161 : vector<8x128xf32>
      %cst_50 = arith.constant 2.000000e+00 : f32
      %210 = vector.broadcast %cst_50 : f32 to vector<8x128xf32>
      %211 = arith.mulf %210, %209 : vector<8x128xf32>
      %212 = tpu.reciprocal %211 {approx = true} : vector<8x128xf32> -> vector<8x128xf32>
      %213 = arith.mulf %203, %212 : vector<8x128xf32>
      %214 = arith.mulf %197, %213 : vector<8x128xf32>
      %cst_51 = arith.constant 1.000000e+00 : f32
      %215 = vector.broadcast %cst_51 : f32 to vector<8x128xf32>
      %216 = arith.subf %215, %214 : vector<8x128xf32>
      %217 = arith.mulf %197, %197 : vector<8x128xf32>
      %218 = tpu.reciprocal %217 {approx = true} : vector<8x128xf32> -> vector<8x128xf32>
      %219 = arith.mulf %216, %218 : vector<8x128xf32>
      %220 = arith.subf %140, %124 : vector<8x128xf32>
      %221 = arith.mulf %207, %220 : vector<8x128xf32>
      %222 = arith.subf %103, %135 : vector<8x128xf32>
      %223 = arith.mulf %207, %222 : vector<8x128xf32>
      %224 = arith.subf %114, %98 : vector<8x128xf32>
      %225 = arith.mulf %207, %224 : vector<8x128xf32>
      %226 = arith.mulf %221, %221 : vector<8x128xf32>
      %227 = arith.mulf %223, %223 : vector<8x128xf32>
      %228 = arith.mulf %225, %225 : vector<8x128xf32>
      %229 = arith.mulf %221, %223 : vector<8x128xf32>
      %230 = arith.mulf %221, %225 : vector<8x128xf32>
      %231 = arith.mulf %223, %225 : vector<8x128xf32>
      %cst_52 = arith.constant 0.000000e+00 : f32
      %232 = vector.broadcast %cst_52 : f32 to vector<8x128xf32>
      %233 = arith.subf %232, %225 : vector<8x128xf32>
      %cst_53 = arith.constant 0.000000e+00 : f32
      %234 = vector.broadcast %cst_53 : f32 to vector<8x128xf32>
      %235 = arith.subf %234, %221 : vector<8x128xf32>
      %cst_54 = arith.constant 0.000000e+00 : f32
      %236 = vector.broadcast %cst_54 : f32 to vector<8x128xf32>
      %237 = arith.subf %236, %223 : vector<8x128xf32>
      %238 = arith.addf %227, %228 : vector<8x128xf32>
      %cst_55 = arith.constant 0.000000e+00 : f32
      %239 = vector.broadcast %cst_55 : f32 to vector<8x128xf32>
      %240 = arith.subf %239, %238 : vector<8x128xf32>
      %241 = arith.addf %226, %228 : vector<8x128xf32>
      %cst_56 = arith.constant 0.000000e+00 : f32
      %242 = vector.broadcast %cst_56 : f32 to vector<8x128xf32>
      %243 = arith.subf %242, %241 : vector<8x128xf32>
      %244 = arith.addf %226, %227 : vector<8x128xf32>
      %cst_57 = arith.constant 0.000000e+00 : f32
      %245 = vector.broadcast %cst_57 : f32 to vector<8x128xf32>
      %246 = arith.subf %245, %244 : vector<8x128xf32>
      %247 = arith.mulf %219, %240 : vector<8x128xf32>
      %cst_58 = arith.constant 1.000000e+00 : f32
      %248 = vector.broadcast %cst_58 : f32 to vector<8x128xf32>
      %249 = arith.addf %248, %247 : vector<8x128xf32>
      %cst_59 = arith.constant 5.000000e-01 : f32
      %250 = vector.broadcast %cst_59 : f32 to vector<8x128xf32>
      %251 = arith.mulf %250, %233 : vector<8x128xf32>
      %cst_60 = arith.constant 0.000000e+00 : f32
      %252 = vector.broadcast %cst_60 : f32 to vector<8x128xf32>
      %253 = arith.subf %252, %251 : vector<8x128xf32>
      %254 = arith.mulf %219, %229 : vector<8x128xf32>
      %255 = arith.addf %253, %254 : vector<8x128xf32>
      %cst_61 = arith.constant 5.000000e-01 : f32
      %256 = vector.broadcast %cst_61 : f32 to vector<8x128xf32>
      %257 = arith.mulf %256, %223 : vector<8x128xf32>
      %cst_62 = arith.constant 0.000000e+00 : f32
      %258 = vector.broadcast %cst_62 : f32 to vector<8x128xf32>
      %259 = arith.subf %258, %257 : vector<8x128xf32>
      %260 = arith.mulf %219, %230 : vector<8x128xf32>
      %261 = arith.addf %259, %260 : vector<8x128xf32>
      %cst_63 = arith.constant 5.000000e-01 : f32
      %262 = vector.broadcast %cst_63 : f32 to vector<8x128xf32>
      %263 = arith.mulf %262, %225 : vector<8x128xf32>
      %cst_64 = arith.constant 0.000000e+00 : f32
      %264 = vector.broadcast %cst_64 : f32 to vector<8x128xf32>
      %265 = arith.subf %264, %263 : vector<8x128xf32>
      %266 = arith.mulf %219, %229 : vector<8x128xf32>
      %267 = arith.addf %265, %266 : vector<8x128xf32>
      %268 = arith.mulf %219, %243 : vector<8x128xf32>
      %cst_65 = arith.constant 1.000000e+00 : f32
      %269 = vector.broadcast %cst_65 : f32 to vector<8x128xf32>
      %270 = arith.addf %269, %268 : vector<8x128xf32>
      %cst_66 = arith.constant 5.000000e-01 : f32
      %271 = vector.broadcast %cst_66 : f32 to vector<8x128xf32>
      %272 = arith.mulf %271, %235 : vector<8x128xf32>
      %cst_67 = arith.constant 0.000000e+00 : f32
      %273 = vector.broadcast %cst_67 : f32 to vector<8x128xf32>
      %274 = arith.subf %273, %272 : vector<8x128xf32>
      %275 = arith.mulf %219, %231 : vector<8x128xf32>
      %276 = arith.addf %274, %275 : vector<8x128xf32>
      %cst_68 = arith.constant 5.000000e-01 : f32
      %277 = vector.broadcast %cst_68 : f32 to vector<8x128xf32>
      %278 = arith.mulf %277, %237 : vector<8x128xf32>
      %cst_69 = arith.constant 0.000000e+00 : f32
      %279 = vector.broadcast %cst_69 : f32 to vector<8x128xf32>
      %280 = arith.subf %279, %278 : vector<8x128xf32>
      %281 = arith.mulf %219, %230 : vector<8x128xf32>
      %282 = arith.addf %280, %281 : vector<8x128xf32>
      %cst_70 = arith.constant 5.000000e-01 : f32
      %283 = vector.broadcast %cst_70 : f32 to vector<8x128xf32>
      %284 = arith.mulf %283, %221 : vector<8x128xf32>
      %cst_71 = arith.constant 0.000000e+00 : f32
      %285 = vector.broadcast %cst_71 : f32 to vector<8x128xf32>
      %286 = arith.subf %285, %284 : vector<8x128xf32>
      %287 = arith.mulf %219, %231 : vector<8x128xf32>
      %288 = arith.addf %286, %287 : vector<8x128xf32>
      %289 = arith.mulf %219, %246 : vector<8x128xf32>
      %cst_72 = arith.constant 1.000000e+00 : f32
      %290 = vector.broadcast %cst_72 : f32 to vector<8x128xf32>
      %291 = arith.addf %290, %289 : vector<8x128xf32>
      %292 = arith.mulf %249, %109 : vector<8x128xf32>
      %293 = arith.mulf %255, %130 : vector<8x128xf32>
      %294 = arith.addf %292, %293 : vector<8x128xf32>
      %295 = arith.mulf %261, %151 : vector<8x128xf32>
      %296 = arith.addf %294, %295 : vector<8x128xf32>
      %297 = arith.mulf %267, %109 : vector<8x128xf32>
      %298 = arith.mulf %270, %130 : vector<8x128xf32>
      %299 = arith.addf %297, %298 : vector<8x128xf32>
      %300 = arith.mulf %276, %151 : vector<8x128xf32>
      %301 = arith.addf %299, %300 : vector<8x128xf32>
      %302 = arith.mulf %282, %109 : vector<8x128xf32>
      %303 = arith.mulf %288, %130 : vector<8x128xf32>
      %304 = arith.addf %302, %303 : vector<8x128xf32>
      %305 = arith.mulf %291, %151 : vector<8x128xf32>
      %306 = arith.addf %304, %305 : vector<8x128xf32>
      %cst_73 = arith.constant 0.000000e+00 : f32
      %307 = vector.broadcast %cst_73 : f32 to vector<8x128xf32>
      %c24 = arith.constant 24 : index
      %308 = arith.index_cast %16 : i32 to index
      %c0_74 = arith.constant 0 : index
      %309 = vector.load %arg1[%c24, %308, %c0_74] : memref<30x8x128xf32, #tpu.memory_space<vmem>>, vector<1x8x128xf32>
      %310 = vector.shape_cast %309 : vector<1x8x128xf32> to vector<8x128xf32>
      %311 = arith.subf %221, %310 : vector<8x128xf32>
      %312 = arith.mulf %311, %311 : vector<8x128xf32>
      %cst_75 = arith.constant 9.99999997E-7 : f32
      %313 = vector.broadcast %cst_75 : f32 to vector<8x128xf32>
      %314 = arith.addf %312, %313 : vector<8x128xf32>
      %315 = math.sqrt %314 : vector<8x128xf32>
      %316 = arith.addf %307, %315 : vector<8x128xf32>
      %c25 = arith.constant 25 : index
      %317 = arith.index_cast %16 : i32 to index
      %c0_76 = arith.constant 0 : index
      %318 = vector.load %arg1[%c25, %317, %c0_76] : memref<30x8x128xf32, #tpu.memory_space<vmem>>, vector<1x8x128xf32>
      %319 = vector.shape_cast %318 : vector<1x8x128xf32> to vector<8x128xf32>
      %320 = arith.subf %223, %319 : vector<8x128xf32>
      %321 = arith.mulf %320, %320 : vector<8x128xf32>
      %cst_77 = arith.constant 9.99999997E-7 : f32
      %322 = vector.broadcast %cst_77 : f32 to vector<8x128xf32>
      %323 = arith.addf %321, %322 : vector<8x128xf32>
      %324 = math.sqrt %323 : vector<8x128xf32>
      %325 = arith.addf %316, %324 : vector<8x128xf32>
      %c26 = arith.constant 26 : index
      %326 = arith.index_cast %16 : i32 to index
      %c0_78 = arith.constant 0 : index
      %327 = vector.load %arg1[%c26, %326, %c0_78] : memref<30x8x128xf32, #tpu.memory_space<vmem>>, vector<1x8x128xf32>
      %328 = vector.shape_cast %327 : vector<1x8x128xf32> to vector<8x128xf32>
      %329 = arith.subf %225, %328 : vector<8x128xf32>
      %330 = arith.mulf %329, %329 : vector<8x128xf32>
      %cst_79 = arith.constant 9.99999997E-7 : f32
      %331 = vector.broadcast %cst_79 : f32 to vector<8x128xf32>
      %332 = arith.addf %330, %331 : vector<8x128xf32>
      %333 = math.sqrt %332 : vector<8x128xf32>
      %334 = arith.addf %325, %333 : vector<8x128xf32>
      %c27 = arith.constant 27 : index
      %335 = arith.index_cast %16 : i32 to index
      %c0_80 = arith.constant 0 : index
      %336 = vector.load %arg1[%c27, %335, %c0_80] : memref<30x8x128xf32, #tpu.memory_space<vmem>>, vector<1x8x128xf32>
      %337 = vector.shape_cast %336 : vector<1x8x128xf32> to vector<8x128xf32>
      %338 = arith.subf %296, %337 : vector<8x128xf32>
      %339 = arith.mulf %338, %338 : vector<8x128xf32>
      %cst_81 = arith.constant 9.99999997E-7 : f32
      %340 = vector.broadcast %cst_81 : f32 to vector<8x128xf32>
      %341 = arith.addf %339, %340 : vector<8x128xf32>
      %342 = math.sqrt %341 : vector<8x128xf32>
      %343 = arith.addf %334, %342 : vector<8x128xf32>
      %c28 = arith.constant 28 : index
      %344 = arith.index_cast %16 : i32 to index
      %c0_82 = arith.constant 0 : index
      %345 = vector.load %arg1[%c28, %344, %c0_82] : memref<30x8x128xf32, #tpu.memory_space<vmem>>, vector<1x8x128xf32>
      %346 = vector.shape_cast %345 : vector<1x8x128xf32> to vector<8x128xf32>
      %347 = arith.subf %301, %346 : vector<8x128xf32>
      %348 = arith.mulf %347, %347 : vector<8x128xf32>
      %cst_83 = arith.constant 9.99999997E-7 : f32
      %349 = vector.broadcast %cst_83 : f32 to vector<8x128xf32>
      %350 = arith.addf %348, %349 : vector<8x128xf32>
      %351 = math.sqrt %350 : vector<8x128xf32>
      %352 = arith.addf %343, %351 : vector<8x128xf32>
      %c29 = arith.constant 29 : index
      %353 = arith.index_cast %16 : i32 to index
      %c0_84 = arith.constant 0 : index
      %354 = vector.load %arg1[%c29, %353, %c0_84] : memref<30x8x128xf32, #tpu.memory_space<vmem>>, vector<1x8x128xf32>
      %355 = vector.shape_cast %354 : vector<1x8x128xf32> to vector<8x128xf32>
      %356 = arith.subf %306, %355 : vector<8x128xf32>
      %357 = arith.mulf %356, %356 : vector<8x128xf32>
      %cst_85 = arith.constant 9.99999997E-7 : f32
      %358 = vector.broadcast %cst_85 : f32 to vector<8x128xf32>
      %359 = arith.addf %357, %358 : vector<8x128xf32>
      %360 = math.sqrt %359 : vector<8x128xf32>
      %361 = arith.addf %352, %360 : vector<8x128xf32>
      %362 = arith.mulf %221, %221 : vector<8x128xf32>
      %363 = arith.mulf %223, %223 : vector<8x128xf32>
      %364 = arith.addf %362, %363 : vector<8x128xf32>
      %365 = arith.mulf %225, %225 : vector<8x128xf32>
      %366 = arith.addf %364, %365 : vector<8x128xf32>
      %367 = arith.mulf %296, %296 : vector<8x128xf32>
      %368 = arith.addf %366, %367 : vector<8x128xf32>
      %369 = arith.mulf %301, %301 : vector<8x128xf32>
      %370 = arith.addf %368, %369 : vector<8x128xf32>
      %371 = arith.mulf %306, %306 : vector<8x128xf32>
      %372 = arith.addf %370, %371 : vector<8x128xf32>
      %c1024_i32_86 = arith.constant 1024 : i32
      %373 = arith.muli %c0_i32_4, %c1024_i32_86 : i32
      %374 = arith.addi %0, %373 : i32
      %375 = vector.broadcast %374 : i32 to vector<8x128xi32>
      %376 = arith.addi %375, %14 : vector<8x128xi32>
      %c10_i32_87 = arith.constant 10 : i32
      %377 = vector.broadcast %c10_i32_87 : i32 to vector<8x128xi32>
      %378 = arith.cmpi slt, %376, %377 : vector<8x128xi32>
      %cst_88 = arith.constant 0.000000e+00 : f32
      %379 = vector.broadcast %cst_88 : f32 to vector<8x128xf32>
      %380 = arith.select %378, %361, %379 : vector<8x128xi1>, vector<8x128xf32>
      %c10_i32_89 = arith.constant 10 : i32
      %381 = vector.broadcast %c10_i32_89 : i32 to vector<8x128xi32>
      %382 = arith.cmpi sge, %376, %381 : vector<8x128xi32>
      %c15_i32 = arith.constant 15 : i32
      %383 = vector.broadcast %c15_i32 : i32 to vector<8x128xi32>
      %384 = arith.cmpi slt, %376, %383 : vector<8x128xi32>
      %385 = arith.andi %382, %384 : vector<8x128xi1>
      %cst_90 = arith.constant 0.000000e+00 : f32
      %386 = vector.broadcast %cst_90 : f32 to vector<8x128xf32>
      %387 = arith.select %385, %372, %386 : vector<8x128xi1>, vector<8x128xf32>
      %cst_91 = arith.constant 1.000000e-03 : f32
      %388 = vector.broadcast %cst_91 : f32 to vector<8x128xf32>
      %389 = arith.mulf %388, %387 : vector<8x128xf32>
      %390 = arith.addf %380, %389 : vector<8x128xf32>
      %391 = arith.addf %1, %390 : vector<8x128xf32>
      %c1_i32 = arith.constant 1 : i32
      %c0_92 = arith.constant 0 : index
      %c0_93 = arith.constant 0 : index
      %392 = vector.load %arg2[%c0_92, %c0_93] : memref<8x128xf32, #tpu.memory_space<vmem>>, vector<8x128xf32>
      tpu.vector_store %arg2[%c0_92, %c0_93], %391 {strides = array<i32>} : memref<8x128xf32, #tpu.memory_space<vmem>>, vector<8x128xf32>,
    } else {
    }
    return
  }
  func.func @transform_0(%arg0: i32) -> (i32, i32, i32) {
    %c0_i32 = arith.constant 0 : i32
    %c0_i32_0 = arith.constant 0 : i32
    %c0_i32_1 = arith.constant 0 : i32
    return %c0_i32, %arg0, %c0_i32_0 : i32, i32, i32
  }
  func.func @transform_1(%arg0: i32) -> (i32, i32) {
    %c0_i32 = arith.constant 0 : i32
    %c0_i32_0 = arith.constant 0 : i32
    return %arg0, %c0_i32 : i32, i32
  }
}

</mosaic_0001>

<llo_original>
// kernel: loss_fn.1
$region0: #{loss_fn.1}
  #allocation0 [shape = 'u32[]', space=smem, size = 0x4, offset = 0x4, fixed_abs, tag = 'smem constant byte address 0x4 - core index']
  #allocation1 [shape = 'u32[144,128]{1,0:T(1,128)}', space=vmem, size = 0x12000, scoped, tag = 'internal scratch']
  %s0 = inlined_call_operand.vmem [shape: f32[30,8,128], index: 0, kind: input, shape index: {}]
  %s1 = inlined_call_operand.vmem [shape: f32[8,128], index: 1, kind: output, shape index: {}]
  %s2 = sld [smem:[#allocation0]]
  $region22: #{loss_fn.1} parent=0
    _
  %s4 = ssub.s32 1, %s2
  %s5 = scalar_select 0, %s4, %s2
  // Predicated region
  $region2: #{loss_fn.1} parent=0 // pred_check
    _
  $region3: #{loss_fn.1} parent=0 // pred_check_branch
    %7 = sbr.rel (0) target = $region5
  $region4: #{loss_fn.1} parent=0 // pred_region
    _
  $region5: #{loss_fn.1} parent=0 // pred_fallthru
    _
  %s8 = smul.u32 0, 1024
  %s9 = sadd.s32 %s8, 1024
  %p10 = scmp.le.s32.totalorder %s9, 10
  // Predicated region
  $region6: #{loss_fn.1} parent=0 // pred_check
    %p11 = pneg %p10
  $region7: #{loss_fn.1} parent=0 // pred_check_branch
    %13 = sbr.rel (%p11) target = $region9
  $region8: #{loss_fn.1} parent=0 // pred_region
    %v14 = vld [vmem:[%s0] sm:$0xff]
    %s15 = sadd.s32 0, 8
    %s16 = scalar_lea.vmem %s0, %s15
    %v17 = vld [vmem:[%s16] sm:$0xff]
    %s18 = sadd.s32 0, 16
    %s19 = scalar_lea.vmem %s0, %s18
    %v20 = vld [vmem:[%s19] sm:$0xff]
    %s21 = sadd.s32 0, 24
    %s22 = scalar_lea.vmem %s0, %s21
    %v23 = vld [vmem:[%s22] sm:$0xff]
    %s24 = sadd.s32 0, 32
    %s25 = scalar_lea.vmem %s0, %s24
    %v26 = vld [vmem:[%s25] sm:$0xff]
    %s27 = sadd.s32 0, 40
    %s28 = scalar_lea.vmem %s0, %s27
    %v29 = vld [vmem:[%s28] sm:$0xff]
    %s30 = sadd.s32 0, 48
    %s31 = scalar_lea.vmem %s0, %s30
    %v32 = vld [vmem:[%s31] sm:$0xff]
    %s33 = sadd.s32 0, 56
    %s34 = scalar_lea.vmem %s0, %s33
    %v35 = vld [vmem:[%s34] sm:$0xff]
    %s36 = sadd.s32 0, 64
    %s37 = scalar_lea.vmem %s0, %s36
    %v38 = vld [vmem:[%s37] sm:$0xff]
    %s39 = sadd.s32 0, 72
    %s40 = scalar_lea.vmem %s0, %s39
    %v41 = vld [vmem:[%s40] sm:$0xff]
    %s42 = sadd.s32 0, 80
    %s43 = scalar_lea.vmem %s0, %s42
    %v44 = vld [vmem:[%s43] sm:$0xff]
    %s45 = sadd.s32 0, 88
    %s46 = scalar_lea.vmem %s0, %s45
    %v47 = vld [vmem:[%s46] sm:$0xff]
    %s48 = sadd.s32 0, 96
    %s49 = scalar_lea.vmem %s0, %s48
    %v50 = vld [vmem:[%s49] sm:$0xff]
    %s51 = sadd.s32 0, 104
    %s52 = scalar_lea.vmem %s0, %s51
    %v53 = vld [vmem:[%s52] sm:$0xff]
    %s54 = sadd.s32 0, 112
    %s55 = scalar_lea.vmem %s0, %s54
    %v56 = vld [vmem:[%s55] sm:$0xff]
    %s57 = sadd.s32 0, 120
    %s58 = scalar_lea.vmem %s0, %s57
    %v59 = vld [vmem:[%s58] sm:$0xff]
    %s60 = sadd.s32 0, 128
    %s61 = scalar_lea.vmem %s0, %s60
    %v62 = vld [vmem:[%s61] sm:$0xff]
    %s63 = sadd.s32 0, 136
    %s64 = scalar_lea.vmem %s0, %s63
    %v65 = vld [vmem:[%s64] sm:$0xff]
    %s66 = sadd.s32 0, 144
    %s67 = scalar_lea.vmem %s0, %s66
    %v68 = vld [vmem:[%s67] sm:$0xff]
    %s69 = sadd.s32 0, 152
    %s70 = scalar_lea.vmem %s0, %s69
    %v71 = vld [vmem:[%s70] sm:$0xff]
    %s72 = sadd.s32 0, 160
    %s73 = scalar_lea.vmem %s0, %s72
    %v74 = vld [vmem:[%s73] sm:$0xff]
    %s75 = sadd.s32 0, 168
    %s76 = scalar_lea.vmem %s0, %s75
    %v77 = vld [vmem:[%s76] sm:$0xff]
    %s78 = sadd.s32 0, 176
    %s79 = scalar_lea.vmem %s0, %s78
    %v80 = vld [vmem:[%s79] sm:$0xff]
    %s81 = sadd.s32 0, 184
    %s82 = scalar_lea.vmem %s0, %s81
    %v83 = vld [vmem:[%s82] sm:$0xff]
    %v84 = vmul.f32 %v14, %v50
    %v85 = vmul.f32 %v17, %v62
    %v86 = vadd.f32 %v84, %v85
    %v87 = vmul.f32 %v20, %v74
    %v88 = vadd.f32 %v86, %v87
    %v89 = vmul.f32 %v14, %v53
    %v90 = vmul.f32 %v17, %v65
    %v91 = vadd.f32 %v89, %v90
    %v92 = vmul.f32 %v20, %v77
    %v93 = vadd.f32 %v91, %v92
    %v94 = vmul.f32 %v14, %v56
    %v95 = vmul.f32 %v17, %v68
    %v96 = vadd.f32 %v94, %v95
    %v97 = vmul.f32 %v20, %v80
    %v98 = vadd.f32 %v96, %v97
    %v99 = vmul.f32 %v14, %v59
    %v100 = vmul.f32 %v17, %v71
    %v101 = vadd.f32 %v99, %v100
    %v102 = vmul.f32 %v20, %v83
    %v103 = vadd.f32 %v101, %v102
    %v104 = vadd.f32 %v103, %v23
    %v105 = vmul.f32 %v26, %v50
    %v106 = vmul.f32 %v29, %v62
    %v107 = vadd.f32 %v105, %v106
    %v108 = vmul.f32 %v32, %v74
    %v109 = vadd.f32 %v107, %v108
    %v110 = vmul.f32 %v26, %v53
    %v111 = vmul.f32 %v29, %v65
    %v112 = vadd.f32 %v110, %v111
    %v113 = vmul.f32 %v32, %v77
    %v114 = vadd.f32 %v112, %v113
    %v115 = vmul.f32 %v26, %v56
    %v116 = vmul.f32 %v29, %v68
    %v117 = vadd.f32 %v115, %v116
    %v118 = vmul.f32 %v32, %v80
    %v119 = vadd.f32 %v117, %v118
    %v120 = vmul.f32 %v26, %v59
    %v121 = vmul.f32 %v29, %v71
    %v122 = vadd.f32 %v120, %v121
    %v123 = vmul.f32 %v32, %v83
    %v124 = vadd.f32 %v122, %v123
    %v125 = vadd.f32 %v124, %v35
    %v126 = vmul.f32 %v38, %v50
    %v127 = vmul.f32 %v41, %v62
    %v128 = vadd.f32 %v126, %v127
    %v129 = vmul.f32 %v44, %v74
    %v130 = vadd.f32 %v128, %v129
    %v131 = vmul.f32 %v38, %v53
    %v132 = vmul.f32 %v41, %v65
    %v133 = vadd.f32 %v131, %v132
    %v134 = vmul.f32 %v44, %v77
    %v135 = vadd.f32 %v133, %v134
    %v136 = vmul.f32 %v38, %v56
    %v137 = vmul.f32 %v41, %v68
    %v138 = vadd.f32 %v136, %v137
    %v139 = vmul.f32 %v44, %v80
    %v140 = vadd.f32 %v138, %v139
    %v141 = vmul.f32 %v38, %v59
    %v142 = vmul.f32 %v41, %v71
    %v143 = vadd.f32 %v141, %v142
    %v144 = vmul.f32 %v44, %v83
    %v145 = vadd.f32 %v143, %v144
    %v146 = vadd.f32 %v145, %v47
    %v147 = vadd.f32 %v88, %v114
    %v148 = vadd.f32 %v147, %v140
    %v149 = vsub.f32 %v148, 1.0
    %v150 = vmul.f32 %v149, 0.5
    %v151 = vmax.f32 %v150, -0.999999
    %v152 = vmin.f32 %v151, 0.999999
    %v153 = vand.u32 2147483647, %v152
    %v154 = vmul.f32 %v153, -0.0012624911
    %v155 = vadd.f32 %v154, 0.00667009
    %v156 = vmul.f32 %v155, %v153
    %v157 = vadd.f32 %v156, -0.017088126
    %v158 = vmul.f32 %v157, %v153
    %v159 = vadd.f32 %v158, 0.03089188
    %v160 = vmul.f32 %v159, %v153
    %v161 = vadd.f32 %v160, -0.050174303
    %v162 = vmul.f32 %v161, %v153
    %v163 = vadd.f32 %v162, 0.08897899
    %v164 = vmul.f32 %v163, %v153
    %v165 = vadd.f32 %v164, -0.2145988
    %v166 = vmul.f32 %v165, %v153
    %v167 = vadd.f32 %v166, 1.5707963
    %v168 = vsub.f32 1.0, %v153
    %v169 = vmax.f32 %v168, 0.0
    %v170 = vrsqrt.pop %v169
    %v171 = vmul.f32 %v169, %v170
    %vm172 = vcmp.eq.f32.partialorder %v169, inf
    %v173 = vsel %vm172, %v169, %v171
    %vm174 = vcmp.eq.f32.partialorder %v169, 0.0
    %v175 = vand.u32 %v169, 2147483648
    %v176 = vsel %vm174, %v175, %v173
    %v177 = vmul.f32 %v176, %v167
    %vm178 = vcmp.lt.f32.partialorder %v152, 0.0
    %v179 = vsub.f32 3.1415927, %v177
    %v180 = vsel %vm178, %v179, %v177
    %v181 = vadd.f32 %v180, 1e-06
    %v182 = vmul.f32 %v152, %v152
    %v183 = vsub.f32 1.0, %v182
    %v184 = vmax.f32 %v183, 1e-12
    %v185 = vrsqrt.pop %v184
    %v186 = vmul.f32 %v184, %v185
    %vm187 = vcmp.eq.f32.partialorder %v184, inf
    %v188 = vsel %vm187, %v184, %v186
    %vm189 = vcmp.eq.f32.partialorder %v184, 0.0
    %v190 = vand.u32 %v184, 2147483648
    %v191 = vsel %vm189, %v190, %v188
    %v192 = vmul.f32 %v191, 2.0
    %v193 = vrcp.pop %v192
    %v194 = vmul.f32 %v181, %v193
    %v195 = vsub.f32 1.0, %v152
    %v196 = vmul.f32 %v195, 2.0
    %v197 = vrcp.pop %v196
    %v198 = vmul.f32 %v191, %v197
    %v199 = vmul.f32 %v181, %v198
    %v200 = vsub.f32 1.0, %v199
    %v201 = vmul.f32 %v181, %v181
    %v202 = vrcp.pop %v201
    %v203 = vmul.f32 %v200, %v202
    %v204 = vsub.f32 %v135, %v119
    %v205 = vmul.f32 %v194, %v204
    %v206 = vsub.f32 %v98, %v130
    %v207 = vmul.f32 %v194, %v206
    %v208 = vsub.f32 %v109, %v93
    %v209 = vmul.f32 %v194, %v208
    %v210 = vmul.f32 %v205, %v205
    %v211 = vmul.f32 %v207, %v207
    %v212 = vmul.f32 %v209, %v209
    %v213 = vmul.f32 %v205, %v207
    %v214 = vmul.f32 %v205, %v209
    %v215 = vmul.f32 %v207, %v209
    %v216 = vsub.f32 0.0, %v209
    %v217 = vsub.f32 0.0, %v205
    %v218 = vsub.f32 0.0, %v207
    %v219 = vadd.f32 %v211, %v212
    %v220 = vsub.f32 0.0, %v219
    %v221 = vadd.f32 %v210, %v212
    %v222 = vsub.f32 0.0, %v221
    %v223 = vadd.f32 %v210, %v211
    %v224 = vsub.f32 0.0, %v223
    %v225 = vmul.f32 %v203, %v220
    %v226 = vadd.f32 %v225, 1.0
    %v227 = vmul.f32 %v216, 0.5
    %v228 = vsub.f32 0.0, %v227
    %v229 = vmul.f32 %v203, %v213
    %v230 = vadd.f32 %v228, %v229
    %v231 = vmul.f32 %v207, 0.5
    %v232 = vsub.f32 0.0, %v231
    %v233 = vmul.f32 %v203, %v214
    %v234 = vadd.f32 %v232, %v233
    %v235 = vmul.f32 %v209, 0.5
    %v236 = vsub.f32 0.0, %v235
    %v237 = vadd.f32 %v236, %v229
    %v238 = vmul.f32 %v203, %v222
    %v239 = vadd.f32 %v238, 1.0
    %v240 = vmul.f32 %v217, 0.5
    %v241 = vsub.f32 0.0, %v240
    %v242 = vmul.f32 %v203, %v215
    %v243 = vadd.f32 %v241, %v242
    %v244 = vmul.f32 %v218, 0.5
    %v245 = vsub.f32 0.0, %v244
    %v246 = vadd.f32 %v245, %v233
    %v247 = vmul.f32 %v205, 0.5
    %v248 = vsub.f32 0.0, %v247
    %v249 = vadd.f32 %v248, %v242
    %v250 = vmul.f32 %v203, %v224
    %v251 = vadd.f32 %v250, 1.0
    %v252 = vmul.f32 %v226, %v104
    %v253 = vmul.f32 %v230, %v125
    %v254 = vadd.f32 %v252, %v253
    %v255 = vmul.f32 %v234, %v146
    %v256 = vadd.f32 %v254, %v255
    %v257 = vmul.f32 %v237, %v104
    %v258 = vmul.f32 %v239, %v125
    %v259 = vadd.f32 %v257, %v258
    %v260 = vmul.f32 %v243, %v146
    %v261 = vadd.f32 %v259, %v260
    %v262 = vmul.f32 %v246, %v104
    %v263 = vmul.f32 %v249, %v125
    %v264 = vadd.f32 %v262, %v263
    %v265 = vmul.f32 %v251, %v146
    %v266 = vadd.f32 %v264, %v265
    %s267 = sadd.s32 0, 192
    %s268 = scalar_lea.vmem %s0, %s267
    %v269 = vld [vmem:[%s268] sm:$0xff]
    %v270 = vsub.f32 %v205, %v269
    %v271 = vmul.f32 %v270, %v270
    %v272 = vadd.f32 %v271, 1e-06
    %v273 = vrsqrt.pop %v272
    %v274 = vmul.f32 %v272, %v273
    %vm275 = vcmp.eq.f32.partialorder %v272, inf
    %v276 = vsel %vm275, %v272, %v274
    %vm277 = vcmp.eq.f32.partialorder %v272, 0.0
    %v278 = vand.u32 %v272, 2147483648
    %v279 = vsel %vm277, %v278, %v276
    %v280 = vadd.f32 %v279, 0.0
    %s281 = sadd.s32 0, 200
    %s282 = scalar_lea.vmem %s0, %s281
    %v283 = vld [vmem:[%s282] sm:$0xff]
    %v284 = vsub.f32 %v207, %v283
    %v285 = vmul.f32 %v284, %v284
    %v286 = vadd.f32 %v285, 1e-06
    %v287 = vrsqrt.pop %v286
    %v288 = vmul.f32 %v286, %v287
    %vm289 = vcmp.eq.f32.partialorder %v286, inf
    %v290 = vsel %vm289, %v286, %v288
    %vm291 = vcmp.eq.f32.partialorder %v286, 0.0
    %v292 = vand.u32 %v286, 2147483648
    %v293 = vsel %vm291, %v292, %v290
    %v294 = vadd.f32 %v280, %v293
    %s295 = sadd.s32 0, 208
    %s296 = scalar_lea.vmem %s0, %s295
    %v297 = vld [vmem:[%s296] sm:$0xff]
    %v298 = vsub.f32 %v209, %v297
    %v299 = vmul.f32 %v298, %v298
    %v300 = vadd.f32 %v299, 1e-06
    %v301 = vrsqrt.pop %v300
    %v302 = vmul.f32 %v300, %v301
    %vm303 = vcmp.eq.f32.partialorder %v300, inf
    %v304 = vsel %vm303, %v300, %v302
    %vm305 = vcmp.eq.f32.partialorder %v300, 0.0
    %v306 = vand.u32 %v300, 2147483648
    %v307 = vsel %vm305, %v306, %v304
    %v308 = vadd.f32 %v294, %v307
    %s309 = sadd.s32 0, 216
    %s310 = scalar_lea.vmem %s0, %s309
    %v311 = vld [vmem:[%s310] sm:$0xff]
    %v312 = vsub.f32 %v256, %v311
    %v313 = vmul.f32 %v312, %v312
    %v314 = vadd.f32 %v313, 1e-06
    %v315 = vrsqrt.pop %v314
    %v316 = vmul.f32 %v314, %v315
    %vm317 = vcmp.eq.f32.partialorder %v314, inf
    %v318 = vsel %vm317, %v314, %v316
    %vm319 = vcmp.eq.f32.partialorder %v314, 0.0
    %v320 = vand.u32 %v314, 2147483648
    %v321 = vsel %vm319, %v320, %v318
    %v322 = vadd.f32 %v308, %v321
    %s323 = sadd.s32 0, 224
    %s324 = scalar_lea.vmem %s0, %s323
    %v325 = vld [vmem:[%s324] sm:$0xff]
    %v326 = vsub.f32 %v261, %v325
    %v327 = vmul.f32 %v326, %v326
    %v328 = vadd.f32 %v327, 1e-06
    %v329 = vrsqrt.pop %v328
    %v330 = vmul.f32 %v328, %v329
    %vm331 = vcmp.eq.f32.partialorder %v328, inf
    %v332 = vsel %vm331, %v328, %v330
    %vm333 = vcmp.eq.f32.partialorder %v328, 0.0
    %v334 = vand.u32 %v328, 2147483648
    %v335 = vsel %vm333, %v334, %v332
    %v336 = vadd.f32 %v322, %v335
    %s337 = sadd.s32 0, 232
    %s338 = scalar_lea.vmem %s0, %s337
    %v339 = vld [vmem:[%s338] sm:$0xff]
    %v340 = vsub.f32 %v266, %v339
    %v341 = vmul.f32 %v340, %v340
    %v342 = vadd.f32 %v341, 1e-06
    %v343 = vrsqrt.pop %v342
    %v344 = vmul.f32 %v342, %v343
    %vm345 = vcmp.eq.f32.partialorder %v342, inf
    %v346 = vsel %vm345, %v342, %v344
    %vm347 = vcmp.eq.f32.partialorder %v342, 0.0
    %v348 = vand.u32 %v342, 2147483648
    %v349 = vsel %vm347, %v348, %v346
    %v350 = vadd.f32 %v336, %v349
    %v351 = vadd.f32 %v350, 0.0
    %352 = vst [vmem:[%s1] sm:$0xff] %v351
  $region9: #{loss_fn.1} parent=0 // pred_fallthru
    _
  %p353 = scmp.gt.s32.totalorder %s9, 10
  // Predicated region
  $region10: #{loss_fn.1} parent=0 // pred_check
    %p354 = pneg %p353
  $region11: #{loss_fn.1} parent=0 // pred_check_branch
    %356 = sbr.rel (%p354) target = $region13
  $region12: #{loss_fn.1} parent=0 // pred_region
    %v357 = vlaneseq
    %v358 = vshrl.u32 %v357, 7
    %v359 = vlaneseq
    %v360 = vand.u32 %v359, 127
    %v361 = vmul.u32 %v358, 128
    %v362 = vadd.s32 %v361, %v360
    %v363 = vld [vmem:[%s0] sm:$0xff]
    %s364 = sadd.s32 0, 8
    %s365 = scalar_lea.vmem %s0, %s364
    %v366 = vld [vmem:[%s365] sm:$0xff]
    %s367 = sadd.s32 0, 16
    %s368 = scalar_lea.vmem %s0, %s367
    %v369 = vld [vmem:[%s368] sm:$0xff]
    %s370 = sadd.s32 0, 24
    %s371 = scalar_lea.vmem %s0, %s370
    %v372 = vld [vmem:[%s371] sm:$0xff]
    %s373 = sadd.s32 0, 32
    %s374 = scalar_lea.vmem %s0, %s373
    %v375 = vld [vmem:[%s374] sm:$0xff]
    %s376 = sadd.s32 0, 40
    %s377 = scalar_lea.vmem %s0, %s376
    %v378 = vld [vmem:[%s377] sm:$0xff]
    %s379 = sadd.s32 0, 48
    %s380 = scalar_lea.vmem %s0, %s379
    %v381 = vld [vmem:[%s380] sm:$0xff]
    %s382 = sadd.s32 0, 56
    %s383 = scalar_lea.vmem %s0, %s382
    %v384 = vld [vmem:[%s383] sm:$0xff]
    %s385 = sadd.s32 0, 64
    %s386 = scalar_lea.vmem %s0, %s385
    %v387 = vld [vmem:[%s386] sm:$0xff]
    %s388 = sadd.s32 0, 72
    %s389 = scalar_lea.vmem %s0, %s388
    %v390 = vld [vmem:[%s389] sm:$0xff]
    %s391 = sadd.s32 0, 80
    %s392 = scalar_lea.vmem %s0, %s391
    %v393 = vld [vmem:[%s392] sm:$0xff]
    %s394 = sadd.s32 0, 88
    %s395 = scalar_lea.vmem %s0, %s394
    %v396 = vld [vmem:[%s395] sm:$0xff]
    %s397 = sadd.s32 0, 96
    %s398 = scalar_lea.vmem %s0, %s397
    %v399 = vld [vmem:[%s398] sm:$0xff]
    %s400 = sadd.s32 0, 104
    %s401 = scalar_lea.vmem %s0, %s400
    %v402 = vld [vmem:[%s401] sm:$0xff]
    %s403 = sadd.s32 0, 112
    %s404 = scalar_lea.vmem %s0, %s403
    %v405 = vld [vmem:[%s404] sm:$0xff]
    %s406 = sadd.s32 0, 120
    %s407 = scalar_lea.vmem %s0, %s406
    %v408 = vld [vmem:[%s407] sm:$0xff]
    %s409 = sadd.s32 0, 128
    %s410 = scalar_lea.vmem %s0, %s409
    %v411 = vld [vmem:[%s410] sm:$0xff]
    %s412 = sadd.s32 0, 136
    %s413 = scalar_lea.vmem %s0, %s412
    %v414 = vld [vmem:[%s413] sm:$0xff]
    %s415 = sadd.s32 0, 144
    %s416 = scalar_lea.vmem %s0, %s415
    %v417 = vld [vmem:[%s416] sm:$0xff]
    %s418 = sadd.s32 0, 152
    %s419 = scalar_lea.vmem %s0, %s418
    %v420 = vld [vmem:[%s419] sm:$0xff]
    %s421 = sadd.s32 0, 160
    %s422 = scalar_lea.vmem %s0, %s421
    %v423 = vld [vmem:[%s422] sm:$0xff]
    %s424 = sadd.s32 0, 168
    %s425 = scalar_lea.vmem %s0, %s424
    %v426 = vld [vmem:[%s425] sm:$0xff]
    %s427 = sadd.s32 0, 176
    %s428 = scalar_lea.vmem %s0, %s427
    %v429 = vld [vmem:[%s428] sm:$0xff]
    %s430 = sadd.s32 0, 184
    %s431 = scalar_lea.vmem %s0, %s430
    %v432 = vld [vmem:[%s431] sm:$0xff]
    %v433 = vmul.f32 %v363, %v399
    %v434 = vmul.f32 %v366, %v411
    %v435 = vadd.f32 %v433, %v434
    %v436 = vmul.f32 %v369, %v423
    %v437 = vadd.f32 %v435, %v436
    %v438 = vmul.f32 %v363, %v402
    %v439 = vmul.f32 %v366, %v414
    %v440 = vadd.f32 %v438, %v439
    %v441 = vmul.f32 %v369, %v426
    %v442 = vadd.f32 %v440, %v441
    %v443 = vmul.f32 %v363, %v405
    %v444 = vmul.f32 %v366, %v417
    %v445 = vadd.f32 %v443, %v444
    %v446 = vmul.f32 %v369, %v429
    %v447 = vadd.f32 %v445, %v446
    %v448 = vmul.f32 %v363, %v408
    %v449 = vmul.f32 %v366, %v420
    %v450 = vadd.f32 %v448, %v449
    %v451 = vmul.f32 %v369, %v432
    %v452 = vadd.f32 %v450, %v451
    %v453 = vadd.f32 %v452, %v372
    %v454 = vmul.f32 %v375, %v399
    %v455 = vmul.f32 %v378, %v411
    %v456 = vadd.f32 %v454, %v455
    %v457 = vmul.f32 %v381, %v423
    %v458 = vadd.f32 %v456, %v457
    %v459 = vmul.f32 %v375, %v402
    %v460 = vmul.f32 %v378, %v414
    %v461 = vadd.f32 %v459, %v460
    %v462 = vmul.f32 %v381, %v426
    %v463 = vadd.f32 %v461, %v462
    %v464 = vmul.f32 %v375, %v405
    %v465 = vmul.f32 %v378, %v417
    %v466 = vadd.f32 %v464, %v465
    %v467 = vmul.f32 %v381, %v429
    %v468 = vadd.f32 %v466, %v467
    %v469 = vmul.f32 %v375, %v408
    %v470 = vmul.f32 %v378, %v420
    %v471 = vadd.f32 %v469, %v470
    %v472 = vmul.f32 %v381, %v432
    %v473 = vadd.f32 %v471, %v472
    %v474 = vadd.f32 %v473, %v384
    %v475 = vmul.f32 %v387, %v399
    %v476 = vmul.f32 %v390, %v411
    %v477 = vadd.f32 %v475, %v476
    %v478 = vmul.f32 %v393, %v423
    %v479 = vadd.f32 %v477, %v478
    %v480 = vmul.f32 %v387, %v402
    %v481 = vmul.f32 %v390, %v414
    %v482 = vadd.f32 %v480, %v481
    %v483 = vmul.f32 %v393, %v426
    %v484 = vadd.f32 %v482, %v483
    %v485 = vmul.f32 %v387, %v405
    %v486 = vmul.f32 %v390, %v417
    %v487 = vadd.f32 %v485, %v486
    %v488 = vmul.f32 %v393, %v429
    %v489 = vadd.f32 %v487, %v488
    %v490 = vmul.f32 %v387, %v408
    %v491 = vmul.f32 %v390, %v420
    %v492 = vadd.f32 %v490, %v491
    %v493 = vmul.f32 %v393, %v432
    %v494 = vadd.f32 %v492, %v493
    %v495 = vadd.f32 %v494, %v396
    %v496 = vadd.f32 %v437, %v463
    %v497 = vadd.f32 %v496, %v489
    %v498 = vsub.f32 %v497, 1.0
    %v499 = vmul.f32 %v498, 0.5
    %v500 = vmax.f32 %v499, -0.999999
    %v501 = vmin.f32 %v500, 0.999999
    %v502 = vand.u32 2147483647, %v501
    %v503 = vmul.f32 %v502, -0.0012624911
    %v504 = vadd.f32 %v503, 0.00667009
    %v505 = vmul.f32 %v504, %v502
    %v506 = vadd.f32 %v505, -0.017088126
    %v507 = vmul.f32 %v506, %v502
    %v508 = vadd.f32 %v507, 0.03089188
    %v509 = vmul.f32 %v508, %v502
    %v510 = vadd.f32 %v509, -0.050174303
    %v511 = vmul.f32 %v510, %v502
    %v512 = vadd.f32 %v511, 0.08897899
    %v513 = vmul.f32 %v512, %v502
    %v514 = vadd.f32 %v513, -0.2145988
    %v515 = vmul.f32 %v514, %v502
    %v516 = vadd.f32 %v515, 1.5707963
    %v517 = vsub.f32 1.0, %v502
    %v518 = vmax.f32 %v517, 0.0
    %v519 = vrsqrt.pop %v518
    %v520 = vmul.f32 %v518, %v519
    %vm521 = vcmp.eq.f32.partialorder %v518, inf
    %v522 = vsel %vm521, %v518, %v520
    %vm523 = vcmp.eq.f32.partialorder %v518, 0.0
    %v524 = vand.u32 %v518, 2147483648
    %v525 = vsel %vm523, %v524, %v522
    %v526 = vmul.f32 %v525, %v516
    %vm527 = vcmp.lt.f32.partialorder %v501, 0.0
    %v528 = vsub.f32 3.1415927, %v526
    %v529 = vsel %vm527, %v528, %v526
    %v530 = vadd.f32 %v529, 1e-06
    %v531 = vmul.f32 %v501, %v501
    %v532 = vsub.f32 1.0, %v531
    %v533 = vmax.f32 %v532, 1e-12
    %v534 = vrsqrt.pop %v533
    %v535 = vmul.f32 %v533, %v534
    %vm536 = vcmp.eq.f32.partialorder %v533, inf
    %v537 = vsel %vm536, %v533, %v535
    %vm538 = vcmp.eq.f32.partialorder %v533, 0.0
    %v539 = vand.u32 %v533, 2147483648
    %v540 = vsel %vm538, %v539, %v537
    %v541 = vmul.f32 %v540, 2.0
    %v542 = vrcp.pop %v541
    %v543 = vmul.f32 %v530, %v542
    %v544 = vsub.f32 1.0, %v501
    %v545 = vmul.f32 %v544, 2.0
    %v546 = vrcp.pop %v545
    %v547 = vmul.f32 %v540, %v546
    %v548 = vmul.f32 %v530, %v547
    %v549 = vsub.f32 1.0, %v548
    %v550 = vmul.f32 %v530, %v530
    %v551 = vrcp.pop %v550
    %v552 = vmul.f32 %v549, %v551
    %v553 = vsub.f32 %v484, %v468
    %v554 = vmul.f32 %v543, %v553
    %v555 = vsub.f32 %v447, %v479
    %v556 = vmul.f32 %v543, %v555
    %v557 = vsub.f32 %v458, %v442
    %v558 = vmul.f32 %v543, %v557
    %v559 = vmul.f32 %v554, %v554
    %v560 = vmul.f32 %v556, %v556
    %v561 = vmul.f32 %v558, %v558
    %v562 = vmul.f32 %v554, %v556
    %v563 = vmul.f32 %v554, %v558
    %v564 = vmul.f32 %v556, %v558
    %v565 = vsub.f32 0.0, %v558
    %v566 = vsub.f32 0.0, %v554
    %v567 = vsub.f32 0.0, %v556
    %v568 = vadd.f32 %v560, %v561
    %v569 = vsub.f32 0.0, %v568
    %v570 = vadd.f32 %v559, %v561
    %v571 = vsub.f32 0.0, %v570
    %v572 = vadd.f32 %v559, %v560
    %v573 = vsub.f32 0.0, %v572
    %v574 = vmul.f32 %v552, %v569
    %v575 = vadd.f32 %v574, 1.0
    %v576 = vmul.f32 %v565, 0.5
    %v577 = vsub.f32 0.0, %v576
    %v578 = vmul.f32 %v552, %v562
    %v579 = vadd.f32 %v577, %v578
    %v580 = vmul.f32 %v556, 0.5
    %v581 = vsub.f32 0.0, %v580
    %v582 = vmul.f32 %v552, %v563
    %v583 = vadd.f32 %v581, %v582
    %v584 = vmul.f32 %v558, 0.5
    %v585 = vsub.f32 0.0, %v584
    %v586 = vadd.f32 %v585, %v578
    %v587 = vmul.f32 %v552, %v571
    %v588 = vadd.f32 %v587, 1.0
    %v589 = vmul.f32 %v566, 0.5
    %v590 = vsub.f32 0.0, %v589
    %v591 = vmul.f32 %v552, %v564
    %v592 = vadd.f32 %v590, %v591
    %v593 = vmul.f32 %v567, 0.5
    %v594 = vsub.f32 0.0, %v593
    %v595 = vadd.f32 %v594, %v582
    %v596 = vmul.f32 %v554, 0.5
    %v597 = vsub.f32 0.0, %v596
    %v598 = vadd.f32 %v597, %v591
    %v599 = vmul.f32 %v552, %v573
    %v600 = vadd.f32 %v599, 1.0
    %v601 = vmul.f32 %v575, %v453
    %v602 = vmul.f32 %v579, %v474
    %v603 = vadd.f32 %v601, %v602
    %v604 = vmul.f32 %v583, %v495
    %v605 = vadd.f32 %v603, %v604
    %v606 = vmul.f32 %v586, %v453
    %v607 = vmul.f32 %v588, %v474
    %v608 = vadd.f32 %v606, %v607
    %v609 = vmul.f32 %v592, %v495
    %v610 = vadd.f32 %v608, %v609
    %v611 = vmul.f32 %v595, %v453
    %v612 = vmul.f32 %v598, %v474
    %v613 = vadd.f32 %v611, %v612
    %v614 = vmul.f32 %v600, %v495
    %v615 = vadd.f32 %v613, %v614
    %s616 = sadd.s32 0, 192
    %s617 = scalar_lea.vmem %s0, %s616
    %v618 = vld [vmem:[%s617] sm:$0xff]
    %v619 = vsub.f32 %v554, %v618
    %v620 = vmul.f32 %v619, %v619
    %v621 = vadd.f32 %v620, 1e-06
    %v622 = vrsqrt.pop %v621
    %v623 = vmul.f32 %v621, %v622
    %vm624 = vcmp.eq.f32.partialorder %v621, inf
    %v625 = vsel %vm624, %v621, %v623
    %vm626 = vcmp.eq.f32.partialorder %v621, 0.0
    %v627 = vand.u32 %v621, 2147483648
    %v628 = vsel %vm626, %v627, %v625
    %v629 = vadd.f32 %v628, 0.0
    %s630 = sadd.s32 0, 200
    %s631 = scalar_lea.vmem %s0, %s630
    %v632 = vld [vmem:[%s631] sm:$0xff]
    %v633 = vsub.f32 %v556, %v632
    %v634 = vmul.f32 %v633, %v633
    %v635 = vadd.f32 %v634, 1e-06
    %v636 = vrsqrt.pop %v635
    %v637 = vmul.f32 %v635, %v636
    %vm638 = vcmp.eq.f32.partialorder %v635, inf
    %v639 = vsel %vm638, %v635, %v637
    %vm640 = vcmp.eq.f32.partialorder %v635, 0.0
    %v641 = vand.u32 %v635, 2147483648
    %v642 = vsel %vm640, %v641, %v639
    %v643 = vadd.f32 %v629, %v642
    %s644 = sadd.s32 0, 208
    %s645 = scalar_lea.vmem %s0, %s644
    %v646 = vld [vmem:[%s645] sm:$0xff]
    %v647 = vsub.f32 %v558, %v646
    %v648 = vmul.f32 %v647, %v647
    %v649 = vadd.f32 %v648, 1e-06
    %v650 = vrsqrt.pop %v649
    %v651 = vmul.f32 %v649, %v650
    %vm652 = vcmp.eq.f32.partialorder %v649, inf
    %v653 = vsel %vm652, %v649, %v651
    %vm654 = vcmp.eq.f32.partialorder %v649, 0.0
    %v655 = vand.u32 %v649, 2147483648
    %v656 = vsel %vm654, %v655, %v653
    %v657 = vadd.f32 %v643, %v656
    %s658 = sadd.s32 0, 216
    %s659 = scalar_lea.vmem %s0, %s658
    %v660 = vld [vmem:[%s659] sm:$0xff]
    %v661 = vsub.f32 %v605, %v660
    %v662 = vmul.f32 %v661, %v661
    %v663 = vadd.f32 %v662, 1e-06
    %v664 = vrsqrt.pop %v663
    %v665 = vmul.f32 %v663, %v664
    %vm666 = vcmp.eq.f32.partialorder %v663, inf
    %v667 = vsel %vm666, %v663, %v665
    %vm668 = vcmp.eq.f32.partialorder %v663, 0.0
    %v669 = vand.u32 %v663, 2147483648
    %v670 = vsel %vm668, %v669, %v667
    %v671 = vadd.f32 %v657, %v670
    %s672 = sadd.s32 0, 224
    %s673 = scalar_lea.vmem %s0, %s672
    %v674 = vld [vmem:[%s673] sm:$0xff]
    %v675 = vsub.f32 %v610, %v674
    %v676 = vmul.f32 %v675, %v675
    %v677 = vadd.f32 %v676, 1e-06
    %v678 = vrsqrt.pop %v677
    %v679 = vmul.f32 %v677, %v678
    %vm680 = vcmp.eq.f32.partialorder %v677, inf
    %v681 = vsel %vm680, %v677, %v679
    %vm682 = vcmp.eq.f32.partialorder %v677, 0.0
    %v683 = vand.u32 %v677, 2147483648
    %v684 = vsel %vm682, %v683, %v681
    %v685 = vadd.f32 %v671, %v684
    %s686 = sadd.s32 0, 232
    %s687 = scalar_lea.vmem %s0, %s686
    %v688 = vld [vmem:[%s687] sm:$0xff]
    %v689 = vsub.f32 %v615, %v688
    %v690 = vmul.f32 %v689, %v689
    %v691 = vadd.f32 %v690, 1e-06
    %v692 = vrsqrt.pop %v691
    %v693 = vmul.f32 %v691, %v692
    %vm694 = vcmp.eq.f32.partialorder %v691, inf
    %v695 = vsel %vm694, %v691, %v693
    %vm696 = vcmp.eq.f32.partialorder %v691, 0.0
    %v697 = vand.u32 %v691, 2147483648
    %v698 = vsel %vm696, %v697, %v695
    %v699 = vadd.f32 %v685, %v698
    %v700 = vadd.f32 %v572, %v561
    %v701 = vmul.f32 %v605, %v605
    %v702 = vadd.f32 %v700, %v701
    %v703 = vmul.f32 %v610, %v610
    %v704 = vadd.f32 %v702, %v703
    %v705 = vmul.f32 %v615, %v615
    %v706 = vadd.f32 %v704, %v705
    %v707 = vstv %s8
    %v708 = vadd.s32 %v707, %v362
    %vm709 = vcmp.lt.s32.totalorder %v708, 10
    %v710 = vsel %vm709, %v699, 0.0
    %vm711 = vcmp.ge.s32.totalorder %v708, 10
    %vm712 = vcmp.lt.s32.totalorder %v708, 15
    %vm713 = vmand %vm711, %vm712
    %v714 = vsel %vm713, %v706, 0.0
    %v715 = vmul.f32 %v714, 0.001
    %v716 = vadd.f32 %v710, %v715
    %v717 = vadd.f32 %v716, 0.0
    %718 = vst [vmem:[%s1] sm:$0xff] %v717
  $region13: #{loss_fn.1} parent=0 // pred_fallthru
    _
  // Predicated region
  $region14: #{loss_fn.1} parent=0 // pred_check
    _
  $region15: #{loss_fn.1} parent=0 // pred_check_branch
    %720 = sbr.rel (0) target = $region17
  $region16: #{loss_fn.1} parent=0 // pred_region
    _
  $region17: #{loss_fn.1} parent=0 // pred_fallthru
    _
  // Predicated region
  $region18: #{loss_fn.1} parent=0 // pred_check
    _
  $region19: #{loss_fn.1} parent=0 // pred_check_branch
    %722 = sbr.rel (0) target = $region21
  $region20: #{loss_fn.1} parent=0 // pred_region
    _
  $region21: #{loss_fn.1} parent=0 // pred_fallthru
    _

</llo_original>
